<compile_context>
chip_gen: v7x
topology: tpu7x:2x2x1
jax: 0.10.0
libtpu: 0.0.40
codegen_flags: <defaults>
</compile_context>

<pallas_src>
import math

import jax
import jax.numpy as jnp
from jax import lax
from jax.experimental import pallas as pl
from jax.experimental.pallas import tpu as pltpu


def _choose_l_block(L, max_block=256):
    """Largest L-tile <= max_block that divides L (multiple of 8 when tiling)."""
    if L <= max_block:
        return L
    start = max_block - (max_block % 8)
    for blk in range(start, 7, -8):
        if L % blk == 0:
            return blk
    return L  # fallback: single block


def _make_anomaly_attention_kernel(scale, mask_flag, l_block, n_heads):
    ln3 = math.log(3.0)
    c_norm = 1.0 / math.sqrt(2.0 * math.pi)

    def kernel(q_ref, k_ref, v_ref, sig_ref,
               vout_ref, series_ref, prior_ref, sigout_ref):
        l_idx = pl.program_id(1)

        q_all = q_ref[0]                               # (Lb, H*E)
        k_all = k_ref[0]                               # (S,  H*E)
        v_all = v_ref[0]                               # (S,  H*D)
        sig = sig_ref[0].astype(jnp.float32)           # (Lb, H)

        lb = q_all.shape[0]
        s = k_all.shape[0]
        e = q_all.shape[1] // n_heads
        d = v_all.shape[1] // n_heads

        # ---- sigma transform: sigmoid(5x) + 1e-5 ; 3**x - 1 ------------------
        sg = jax.nn.sigmoid(sig * 5.0) + 1e-5
        sg = jnp.exp(sg * ln3) - 1.0                   # == 3**sg - 1, (Lb, H)
        sigout_ref[0] = sg.astype(sigout_ref.dtype)    # compact store (no L*S bcast)
        inv_sg = pl.reciprocal(sg)                     # (Lb, H) -> EUP, not VPU divide

        # ---- distance / causal-mask grids shared by all heads ----------------
        row = l_idx * l_block + lax.broadcasted_iota(jnp.int32, (lb, s), 0)
        col = lax.broadcasted_iota(jnp.int32, (lb, s), 1)
        diff = (row - col).astype(jnp.float32)
        neg_half_d2 = -0.5 * diff * diff               # (Lb, S)
        causal = (col > row) if mask_flag else None    # TriangularCausalMask

        for h in range(n_heads):                       # unrolled; H is small
            q_h = q_all[:, h * e:(h + 1) * e]          # (Lb, E)
            k_h = k_all[:, h * e:(h + 1) * e]          # (S,  E)
            v_h = v_all[:, h * d:(h + 1) * d]          # (S,  D)

            # scores / masked softmax -> series   ("blhe,bshe->bhls")
            scores = lax.dot_general(q_h, k_h, (((1,), (1,)), ((), ())),
                                     preferred_element_type=jnp.float32)
            attn = scale * scores                      # (Lb, S) f32
            if mask_flag:
                attn = jnp.where(causal, -jnp.inf, attn)
            m = jnp.max(attn, axis=-1, keepdims=True)
            p = jnp.exp(attn - m)
            inv_den = pl.reciprocal(jnp.sum(p, axis=-1, keepdims=True))
            series_h = p * inv_den
            series_ref[0, h] = series_h.astype(series_ref.dtype)  # store early

            # V = series @ values   ("bhls,bshd->blhd"), head-flattened store
            out_h = jnp.dot(series_h.astype(v_h.dtype), v_h,
                            preferred_element_type=jnp.float32)   # (Lb, D)
            vout_ref[0, :, h * d:(h + 1) * d] = out_h.astype(vout_ref.dtype)

            # Gaussian prior: 1/(sqrt(2*pi)*sg) * exp(-dist^2 / (2*sg^2))
            inv_sg_h = inv_sg[:, h:h + 1]              # (Lb, 1)
            prior_h = (c_norm * inv_sg_h) * jnp.exp(
                neg_half_d2 * (inv_sg_h * inv_sg_h))
            prior_ref[0, h] = prior_h.astype(prior_ref.dtype)

    return kernel


class AnomalyAttentionPallas:
    """Pallas TPU port of the PyTorch AnomalyAttention module (eval mode)."""

    def __init__(self, win_size, mask_flag=True, scale=None,
                 attention_dropout=0.0, output_attention=False,
                 attn_out_dtype=jnp.float32):
        self.win_size = win_size            # distances are generated in-kernel
        self.mask_flag = mask_flag
        self.scale = scale
        self.output_attention = output_attention
        self.attn_out_dtype = attn_out_dtype  # bf16 halves series/prior HBM writeback
        # TODO(synk): attention_dropout (training-mode nn.Dropout on the softmax)
        # is not implemented; p=0 / eval mode is exact.
        del attention_dropout

    def __call__(self, queries, keys, values, sigma, attn_mask=None):
        if self.mask_flag and attn_mask is not None:
            # TODO(synk): externally supplied attn_mask tensors are not wired in;
            # only the default in-kernel TriangularCausalMask is supported.
            raise NotImplementedError("only the default TriangularCausalMask is supported")

        B, L, H, E = queries.shape
        _, S, _, D = values.shape
        scale = self.scale if self.scale is not None else 1.0 / math.sqrt(E)

        l_blk = _choose_l_block(L)
        n_l = L // l_blk

        # Free, lane-dense head-flattened views (contiguous reshape, no transpose).
        q2 = queries.reshape(B, L, H * E)
        k2 = keys.reshape(B, S, H * E)
        v2 = values.reshape(B, S, H * D)

        kernel = _make_anomaly_attention_kernel(scale, self.mask_flag, l_blk, H)

        adt = self.attn_out_dtype
        out_shapes = (
            jax.ShapeDtypeStruct((B, L, H * D), values.dtype),  # V (head-flattened)
            jax.ShapeDtypeStruct((B, H, L, S), adt),            # series
            jax.ShapeDtypeStruct((B, H, L, S), adt),            # prior
            jax.ShapeDtypeStruct((B, L, H), jnp.float32),       # sigma (compact)
        )

        # Explicit per-grid-step VMEM budget (double-buffered ins/outs + temps).
        est = 4 * (2 * (l_blk * H * E + S * H * E + S * H * D + l_blk * H)
                   + 2 * (l_blk * H * D + 2 * H * l_blk * S + l_blk * H)
                   + 4 * l_blk * S)
        vmem_limit = int(min(64 * 1024 * 1024, max(32 * 1024 * 1024, 2 * est)))

        v_flat, series, prior, sig_c = pl.pallas_call(
            kernel,
            out_shape=out_shapes,
            grid=(B, n_l),
            in_specs=[
                pl.BlockSpec((1, l_blk, H * E), lambda b, l: (b, l, 0)),
                pl.BlockSpec((1, S, H * E), lambda b, l: (b, 0, 0)),
                pl.BlockSpec((1, S, H * D), lambda b, l: (b, 0, 0)),
                pl.BlockSpec((1, l_blk, H), lambda b, l: (b, l, 0)),
            ],
            out_specs=(
                pl.BlockSpec((1, l_blk, H * D), lambda b, l: (b, l, 0)),
                pl.BlockSpec((1, H, l_blk, S), lambda b, l: (b, 0, l, 0)),
                pl.BlockSpec((1, H, l_blk, S), lambda b, l: (b, 0, l, 0)),
                pl.BlockSpec((1, l_blk, H), lambda b, l: (b, l, 0)),
            ),
            compiler_params=pltpu.CompilerParams(
                dimension_semantics=("parallel", "parallel"),
                vmem_limit_bytes=vmem_limit),
        )(q2, k2, v2, sigma)

        V = v_flat.reshape(B, L, H, D)
        if not self.output_attention:
            return V, None

        # The (B,H,L,S) sigma broadcast the PyTorch module returns is formed
        # lazily outside the kernel from the compact (B,L,H) store.
        sigma_b = jnp.broadcast_to(jnp.swapaxes(sig_c, 1, 2)[..., None],
                                   (B, H, L, S))
        return V, series, prior, sigma_b


def _reference_forward(queries, keys, values, sigma, *, scale, mask_flag):
    """Pure-jnp reference mirroring the PyTorch forward (eval mode)."""
    B, L, H, E = queries.shape
    _, S, _, D = values.shape
    hi = jax.lax.Precision.HIGHEST
    scores = jnp.einsum('blhe,bshe->bhls', queries, keys, precision=hi)
    if mask_flag:
        causal = jnp.triu(jnp.ones((L, S), dtype=bool), k=1)
        scores = jnp.where(causal[None, None], -jnp.inf, scores)
    series = jax.nn.softmax(scale * scores, axis=-1)
    sg = jax.nn.sigmoid(jnp.swapaxes(sigma, 1, 2) * 5.0) + 1e-5     # (B,H,L)
    sg = jnp.power(3.0, sg) - 1.0
    sg_b = jnp.broadcast_to(sg[..., None], (B, H, L, S))
    dist = jnp.abs(jnp.arange(L, dtype=jnp.float32)[:, None]
                   - jnp.arange(S, dtype=jnp.float32)[None, :])
    prior = (1.0 / (math.sqrt(2.0 * math.pi) * sg_b)
             * jnp.exp(-(dist ** 2) / 2.0 / (sg_b ** 2)))
    V = jnp.einsum('bhls,bshd->blhd', series, values, precision=hi)
    return V, series, prior, sg_b


if __name__ == "__main__":
    B, L, H, E = 2, 8, 4, 8
    S, D = L, E
    win_size = L

    key = jax.random.PRNGKey(0)
    kq, kk, kv, ks = jax.random.split(key, 4)
    queries = jax.random.normal(kq, (B, L, H, E), jnp.float32)
    keys = jax.random.normal(kk, (B, S, H, E), jnp.float32)
    values = jax.random.normal(kv, (B, S, H, D), jnp.float32)
    sigma = jax.random.normal(ks, (B, L, H), jnp.float32)

    # ---- unmasked path with output_attention=True (Anomaly-Transformer usage)
    attn = AnomalyAttentionPallas(win_size, mask_flag=False, output_attention=True)
    V, series, prior, sigma_b = attn(queries, keys, values, sigma, attn_mask=None)
    jax.block_until_ready((V, series, prior, sigma_b))

    assert V.shape == (B, L, H, D)
    assert series.shape == (B, H, L, S)
    assert prior.shape == (B, H, L, S)
    assert sigma_b.shape == (B, H, L, S)

    V_r, series_r, prior_r, sigma_r = _reference_forward(
        queries, keys, values, sigma, scale=1.0 / math.sqrt(E), mask_flag=False)
    for got, want, name in ((V, V_r, "V"), (series, series_r, "series"),
                            (prior, prior_r, "prior"), (sigma_b, sigma_r, "sigma")):
        assert bool(jnp.allclose(got, want, rtol=1e-2, atol=1e-2)), name

    # ---- default masked path (TriangularCausalMask generated in-kernel)
    attn_m = AnomalyAttentionPallas(win_size, mask_flag=True, output_attention=False)
    V_m, none_attn = attn_m(queries, keys, values, sigma, attn_mask=None)
    jax.block_until_ready(V_m)
    V_mr, *_ = _reference_forward(queries, keys, values, sigma,
                                  scale=1.0 / math.sqrt(E), mask_flag=True)
    assert none_attn is None
    assert bool(jnp.allclose(V_m, V_mr, rtol=1e-2, atol=1e-2)), "V (masked)"

    print("KERNEL_OK")
</pallas_src>

<mosaic_0001>
module attributes {stable_mosaic.version = 11 : i64} {
  func.func @kernel(%arg0: i32, %arg1: i32, %arg2: memref<1x8x32xf32, #tpu.memory_space<vmem>>, %arg3: memref<1x8x32xf32, #tpu.memory_space<vmem>>, %arg4: memref<1x8x32xf32, #tpu.memory_space<vmem>>, %arg5: memref<1x8x4xf32, #tpu.memory_space<vmem>>, %arg6: memref<1x8x32xf32, #tpu.memory_space<vmem>>, %arg7: memref<1x4x8x8xf32, #tpu.memory_space<vmem>>, %arg8: memref<1x4x8x8xf32, #tpu.memory_space<vmem>>, %arg9: memref<1x8x4xf32, #tpu.memory_space<vmem>>) attributes {dimension_semantics = [#tpu.dimension_semantics<parallel>, #tpu.dimension_semantics<parallel>], iteration_bounds = array<i64: 2, 1>, scalar_prefetch = 0 : i64, scratch_operands = 0 : i64, tpu.core_type = #tpu.core_type<tc>, window_params = [{transform_indices = @transform_0, window_bounds = array<i64: 1, 8, 32>}, {transform_indices = @transform_1, window_bounds = array<i64: 1, 8, 32>}, {transform_indices = @transform_2, window_bounds = array<i64: 1, 8, 32>}, {transform_indices = @transform_3, window_bounds = array<i64: 1, 8, 4>}, {transform_indices = @transform_4, window_bounds = array<i64: 1, 8, 32>}, {transform_indices = @transform_5, window_bounds = array<i64: 1, 4, 8, 8>}, {transform_indices = @transform_6, window_bounds = array<i64: 1, 4, 8, 8>}, {transform_indices = @transform_7, window_bounds = array<i64: 1, 8, 4>}]} {
    %c0 = arith.constant 0 : index
    %c0_0 = arith.constant 0 : index
    %c0_1 = arith.constant 0 : index
    %0 = vector.load %arg2[%c0, %c0_0, %c0_1] : memref<1x8x32xf32, #tpu.memory_space<vmem>>, vector<1x8x32xf32>
    %1 = vector.shape_cast %0 : vector<1x8x32xf32> to vector<8x32xf32>
    %c0_2 = arith.constant 0 : index
    %c0_3 = arith.constant 0 : index
    %c0_4 = arith.constant 0 : index
    %2 = vector.load %arg3[%c0_2, %c0_3, %c0_4] : memref<1x8x32xf32, #tpu.memory_space<vmem>>, vector<1x8x32xf32>
    %3 = vector.shape_cast %2 : vector<1x8x32xf32> to vector<8x32xf32>
    %c0_5 = arith.constant 0 : index
    %c0_6 = arith.constant 0 : index
    %c0_7 = arith.constant 0 : index
    %4 = vector.load %arg4[%c0_5, %c0_6, %c0_7] : memref<1x8x32xf32, #tpu.memory_space<vmem>>, vector<1x8x32xf32>
    %5 = vector.shape_cast %4 : vector<1x8x32xf32> to vector<8x32xf32>
    %c0_8 = arith.constant 0 : index
    %c0_9 = arith.constant 0 : index
    %c0_10 = arith.constant 0 : index
    %6 = vector.load %arg5[%c0_8, %c0_9, %c0_10] : memref<1x8x4xf32, #tpu.memory_space<vmem>>, vector<1x8x4xf32>
    %7 = vector.shape_cast %6 : vector<1x8x4xf32> to vector<8x4xf32>
    %cst = arith.constant 5.000000e+00 : f32
    %8 = vector.broadcast %cst : f32 to vector<8x4xf32>
    %9 = arith.mulf %7, %8 : vector<8x4xf32>
    %10 = arith.negf %9 : vector<8x4xf32>
    %11 = math.exp %10 : vector<8x4xf32>
    %cst_11 = arith.constant 1.000000e+00 : f32
    %12 = vector.broadcast %cst_11 : f32 to vector<8x4xf32>
    %13 = arith.addf %12, %11 : vector<8x4xf32>
    %14 = arith.divf %12, %13 : vector<8x4xf32>
    %cst_12 = arith.constant 9.99999974E-6 : f32
    %15 = vector.broadcast %cst_12 : f32 to vector<8x4xf32>
    %16 = arith.addf %14, %15 : vector<8x4xf32>
    %cst_13 = arith.constant 1.09861231 : f32
    %17 = vector.broadcast %cst_13 : f32 to vector<8x4xf32>
    %18 = arith.mulf %16, %17 : vector<8x4xf32>
    %19 = math.exp %18 : vector<8x4xf32>
    %cst_14 = arith.constant 1.000000e+00 : f32
    %20 = vector.broadcast %cst_14 : f32 to vector<8x4xf32>
    %21 = arith.subf %19, %20 : vector<8x4xf32>
    %c0_15 = arith.constant 0 : index
    %c0_16 = arith.constant 0 : index
    %c0_17 = arith.constant 0 : index
    %22 = vector.load %arg9[%c0_15, %c0_16, %c0_17] : memref<1x8x4xf32, #tpu.memory_space<vmem>>, vector<1x8x4xf32>
    %23 = vector.shape_cast %22 : vector<1x8x4xf32> to vector<8x4xf32>
    %24 = vector.shape_cast %21 : vector<8x4xf32> to vector<1x8x4xf32>
    tpu.vector_store %arg9[%c0_15, %c0_16, %c0_17], %24 {strides = array<i32>} : memref<1x8x4xf32, #tpu.memory_space<vmem>>, vector<1x8x4xf32>,
    %25 = tpu.reciprocal %21 : vector<8x4xf32> -> vector<8x4xf32>
    %c8_i32 = arith.constant 8 : i32
    %26 = arith.muli %arg1, %c8_i32 : i32
    %27 = tpu.iota {dimensions = array<i32: 0>} : vector<8x8xi32>
    %28 = vector.broadcast %26 : i32 to vector<8x8xi32>
    %29 = arith.addi %28, %27 : vector<8x8xi32>
    %30 = tpu.iota {dimensions = array<i32: 1>} : vector<8x8xi32>
    %31 = arith.subi %29, %30 : vector<8x8xi32>
    %32 = arith.sitofp %31 : vector<8x8xi32> to vector<8x8xf32>
    %cst_18 = arith.constant -5.000000e-01 : f32
    %33 = vector.broadcast %cst_18 : f32 to vector<8x8xf32>
    %34 = arith.mulf %33, %32 : vector<8x8xf32>
    %35 = arith.mulf %34, %32 : vector<8x8xf32>
    %36 = vector.extract_strided_slice %1 {offsets = [0, 0], sizes = [8, 8], strides = [1, 1]} : vector<8x32xf32> to vector<8x8xf32>
    %37 = vector.extract_strided_slice %3 {offsets = [0, 0], sizes = [8, 8], strides = [1, 1]} : vector<8x32xf32> to vector<8x8xf32>
    %38 = vector.extract_strided_slice %5 {offsets = [0, 0], sizes = [8, 8], strides = [1, 1]} : vector<8x32xf32> to vector<8x8xf32>
    %cst_19 = arith.constant dense<0.000000e+00> : vector<8x8xf32>
    %39 = tpu.matmul %36, %37, %cst_19 {dimension_numbers = #tpu.dot_dimension_numbers<[1], [1], [0], [0], [0, 0, 1, 0], [], []>} : vector<8x8xf32>, vector<8x8xf32>, vector<8x8xf32> -> vector<8x8xf32>
    %cst_20 = arith.constant 0.353553385 : f32
    %40 = vector.broadcast %cst_20 : f32 to vector<8x8xf32>
    %41 = arith.mulf %40, %39 : vector<8x8xf32>
    %cst_21 = arith.constant dense<0xFF800000> : vector<8xf32>
    %42 = vector.multi_reduction <maximumf>, %41, %cst_21 [1] : vector<8x8xf32> to vector<8xf32>
    %43 = vector.shape_cast %42 : vector<8xf32> to vector<8x1xf32>
    %44 = vector.broadcast %43 : vector<8x1xf32> to vector<8x8xf32>
    %45 = arith.subf %41, %44 : vector<8x8xf32>
    %46 = math.exp %45 : vector<8x8xf32>
    %cst_22 = arith.constant dense<0.000000e+00> : vector<8xf32>
    %47 = vector.multi_reduction <add>, %46, %cst_22 [1] : vector<8x8xf32> to vector<8xf32>
    %48 = vector.shape_cast %47 : vector<8xf32> to vector<8x1xf32>
    %49 = tpu.reciprocal %48 : vector<8x1xf32> -> vector<8x1xf32>
    %50 = vector.broadcast %49 : vector<8x1xf32> to vector<8x8xf32>
    %51 = arith.mulf %46, %50 : vector<8x8xf32>
    %c0_23 = arith.constant 0 : index
    %c0_24 = arith.constant 0 : index
    %c0_25 = arith.constant 0 : index
    %c0_26 = arith.constant 0 : index
    %52 = vector.load %arg7[%c0_23, %c0_24, %c0_25, %c0_26] : memref<1x4x8x8xf32, #tpu.memory_space<vmem>>, vector<1x1x8x8xf32>
    %53 = vector.shape_cast %52 : vector<1x1x8x8xf32> to vector<8x8xf32>
    %54 = vector.shape_cast %51 : vector<8x8xf32> to vector<1x1x8x8xf32>
    tpu.vector_store %arg7[%c0_23, %c0_24, %c0_25, %c0_26], %54 {strides = array<i32>} : memref<1x4x8x8xf32, #tpu.memory_space<vmem>>, vector<1x1x8x8xf32>,
    %cst_27 = arith.constant dense<0.000000e+00> : vector<8x8xf32>
    %55 = tpu.matmul %51, %38, %cst_27 {dimension_numbers = #tpu.dot_dimension_numbers<[1], [0], [0], [1], [0, 0, 1, 1], [], []>} : vector<8x8xf32>, vector<8x8xf32>, vector<8x8xf32> -> vector<8x8xf32>
    %c0_28 = arith.constant 0 : index
    %c0_29 = arith.constant 0 : index
    %c0_30 = arith.constant 0 : index
    %56 = vector.load %arg6[%c0_28, %c0_29, %c0_30] : memref<1x8x32xf32, #tpu.memory_space<vmem>>, vector<1x8x8xf32>
    %57 = vector.shape_cast %56 : vector<1x8x8xf32> to vector<8x8xf32>
    %58 = vector.shape_cast %55 : vector<8x8xf32> to vector<1x8x8xf32>
    tpu.vector_store %arg6[%c0_28, %c0_29, %c0_30], %58 {strides = array<i32>} : memref<1x8x32xf32, #tpu.memory_space<vmem>>, vector<1x8x8xf32>,
    %59 = vector.extract_strided_slice %25 {offsets = [0, 0], sizes = [8, 1], strides = [1, 1]} : vector<8x4xf32> to vector<8x1xf32>
    %cst_31 = arith.constant 0.398942292 : f32
    %60 = vector.broadcast %cst_31 : f32 to vector<8x1xf32>
    %61 = arith.mulf %60, %59 : vector<8x1xf32>
    %62 = arith.mulf %59, %59 : vector<8x1xf32>
    %63 = vector.broadcast %62 : vector<8x1xf32> to vector<8x8xf32>
    %64 = arith.mulf %35, %63 : vector<8x8xf32>
    %65 = math.exp %64 : vector<8x8xf32>
    %66 = vector.broadcast %61 : vector<8x1xf32> to vector<8x8xf32>
    %67 = arith.mulf %66, %65 : vector<8x8xf32>
    %c0_32 = arith.constant 0 : index
    %c0_33 = arith.constant 0 : index
    %c0_34 = arith.constant 0 : index
    %c0_35 = arith.constant 0 : index
    %68 = vector.load %arg8[%c0_32, %c0_33, %c0_34, %c0_35] : memref<1x4x8x8xf32, #tpu.memory_space<vmem>>, vector<1x1x8x8xf32>
    %69 = vector.shape_cast %68 : vector<1x1x8x8xf32> to vector<8x8xf32>
    %70 = vector.shape_cast %67 : vector<8x8xf32> to vector<1x1x8x8xf32>
    tpu.vector_store %arg8[%c0_32, %c0_33, %c0_34, %c0_35], %70 {strides = array<i32>} : memref<1x4x8x8xf32, #tpu.memory_space<vmem>>, vector<1x1x8x8xf32>,
    %71 = vector.extract_strided_slice %1 {offsets = [0, 8], sizes = [8, 8], strides = [1, 1]} : vector<8x32xf32> to vector<8x8xf32>
    %72 = vector.extract_strided_slice %3 {offsets = [0, 8], sizes = [8, 8], strides = [1, 1]} : vector<8x32xf32> to vector<8x8xf32>
    %73 = vector.extract_strided_slice %5 {offsets = [0, 8], sizes = [8, 8], strides = [1, 1]} : vector<8x32xf32> to vector<8x8xf32>
    %cst_36 = arith.constant dense<0.000000e+00> : vector<8x8xf32>
    %74 = tpu.matmul %71, %72, %cst_36 {dimension_numbers = #tpu.dot_dimension_numbers<[1], [1], [0], [0], [0, 0, 1, 0], [], []>} : vector<8x8xf32>, vector<8x8xf32>, vector<8x8xf32> -> vector<8x8xf32>
    %cst_37 = arith.constant 0.353553385 : f32
    %75 = vector.broadcast %cst_37 : f32 to vector<8x8xf32>
    %76 = arith.mulf %75, %74 : vector<8x8xf32>
    %cst_38 = arith.constant dense<0xFF800000> : vector<8xf32>
    %77 = vector.multi_reduction <maximumf>, %76, %cst_38 [1] : vector<8x8xf32> to vector<8xf32>
    %78 = vector.shape_cast %77 : vector<8xf32> to vector<8x1xf32>
    %79 = vector.broadcast %78 : vector<8x1xf32> to vector<8x8xf32>
    %80 = arith.subf %76, %79 : vector<8x8xf32>
    %81 = math.exp %80 : vector<8x8xf32>
    %cst_39 = arith.constant dense<0.000000e+00> : vector<8xf32>
    %82 = vector.multi_reduction <add>, %81, %cst_39 [1] : vector<8x8xf32> to vector<8xf32>
    %83 = vector.shape_cast %82 : vector<8xf32> to vector<8x1xf32>
    %84 = tpu.reciprocal %83 : vector<8x1xf32> -> vector<8x1xf32>
    %85 = vector.broadcast %84 : vector<8x1xf32> to vector<8x8xf32>
    %86 = arith.mulf %81, %85 : vector<8x8xf32>
    %c0_40 = arith.constant 0 : index
    %c1 = arith.constant 1 : index
    %c0_41 = arith.constant 0 : index
    %c0_42 = arith.constant 0 : index
    %87 = vector.load %arg7[%c0_40, %c1, %c0_41, %c0_42] : memref<1x4x8x8xf32, #tpu.memory_space<vmem>>, vector<1x1x8x8xf32>
    %88 = vector.shape_cast %87 : vector<1x1x8x8xf32> to vector<8x8xf32>
    %89 = vector.shape_cast %86 : vector<8x8xf32> to vector<1x1x8x8xf32>
    tpu.vector_store %arg7[%c0_40, %c1, %c0_41, %c0_42], %89 {strides = array<i32>} : memref<1x4x8x8xf32, #tpu.memory_space<vmem>>, vector<1x1x8x8xf32>,
    %cst_43 = arith.constant dense<0.000000e+00> : vector<8x8xf32>
    %90 = tpu.matmul %86, %73, %cst_43 {dimension_numbers = #tpu.dot_dimension_numbers<[1], [0], [0], [1], [0, 0, 1, 1], [], []>} : vector<8x8xf32>, vector<8x8xf32>, vector<8x8xf32> -> vector<8x8xf32>
    %c0_44 = arith.constant 0 : index
    %c0_45 = arith.constant 0 : index
    %c8 = arith.constant 8 : index
    %91 = vector.load %arg6[%c0_44, %c0_45, %c8] : memref<1x8x32xf32, #tpu.memory_space<vmem>>, vector<1x8x8xf32>
    %92 = vector.shape_cast %91 : vector<1x8x8xf32> to vector<8x8xf32>
    %93 = vector.shape_cast %90 : vector<8x8xf32> to vector<1x8x8xf32>
    tpu.vector_store %arg6[%c0_44, %c0_45, %c8], %93 {strides = array<i32>} : memref<1x8x32xf32, #tpu.memory_space<vmem>>, vector<1x8x8xf32>,
    %94 = vector.extract_strided_slice %25 {offsets = [0, 1], sizes = [8, 1], strides = [1, 1]} : vector<8x4xf32> to vector<8x1xf32>
    %cst_46 = arith.constant 0.398942292 : f32
    %95 = vector.broadcast %cst_46 : f32 to vector<8x1xf32>
    %96 = arith.mulf %95, %94 : vector<8x1xf32>
    %97 = arith.mulf %94, %94 : vector<8x1xf32>
    %98 = vector.broadcast %97 : vector<8x1xf32> to vector<8x8xf32>
    %99 = arith.mulf %35, %98 : vector<8x8xf32>
    %100 = math.exp %99 : vector<8x8xf32>
    %101 = vector.broadcast %96 : vector<8x1xf32> to vector<8x8xf32>
    %102 = arith.mulf %101, %100 : vector<8x8xf32>
    %c0_47 = arith.constant 0 : index
    %c1_48 = arith.constant 1 : index
    %c0_49 = arith.constant 0 : index
    %c0_50 = arith.constant 0 : index
    %103 = vector.load %arg8[%c0_47, %c1_48, %c0_49, %c0_50] : memref<1x4x8x8xf32, #tpu.memory_space<vmem>>, vector<1x1x8x8xf32>
    %104 = vector.shape_cast %103 : vector<1x1x8x8xf32> to vector<8x8xf32>
    %105 = vector.shape_cast %102 : vector<8x8xf32> to vector<1x1x8x8xf32>
    tpu.vector_store %arg8[%c0_47, %c1_48, %c0_49, %c0_50], %105 {strides = array<i32>} : memref<1x4x8x8xf32, #tpu.memory_space<vmem>>, vector<1x1x8x8xf32>,
    %106 = vector.extract_strided_slice %1 {offsets = [0, 16], sizes = [8, 8], strides = [1, 1]} : vector<8x32xf32> to vector<8x8xf32>
    %107 = vector.extract_strided_slice %3 {offsets = [0, 16], sizes = [8, 8], strides = [1, 1]} : vector<8x32xf32> to vector<8x8xf32>
    %108 = vector.extract_strided_slice %5 {offsets = [0, 16], sizes = [8, 8], strides = [1, 1]} : vector<8x32xf32> to vector<8x8xf32>
    %cst_51 = arith.constant dense<0.000000e+00> : vector<8x8xf32>
    %109 = tpu.matmul %106, %107, %cst_51 {dimension_numbers = #tpu.dot_dimension_numbers<[1], [1], [0], [0], [0, 0, 1, 0], [], []>} : vector<8x8xf32>, vector<8x8xf32>, vector<8x8xf32> -> vector<8x8xf32>
    %cst_52 = arith.constant 0.353553385 : f32
    %110 = vector.broadcast %cst_52 : f32 to vector<8x8xf32>
    %111 = arith.mulf %110, %109 : vector<8x8xf32>
    %cst_53 = arith.constant dense<0xFF800000> : vector<8xf32>
    %112 = vector.multi_reduction <maximumf>, %111, %cst_53 [1] : vector<8x8xf32> to vector<8xf32>
    %113 = vector.shape_cast %112 : vector<8xf32> to vector<8x1xf32>
    %114 = vector.broadcast %113 : vector<8x1xf32> to vector<8x8xf32>
    %115 = arith.subf %111, %114 : vector<8x8xf32>
    %116 = math.exp %115 : vector<8x8xf32>
    %cst_54 = arith.constant dense<0.000000e+00> : vector<8xf32>
    %117 = vector.multi_reduction <add>, %116, %cst_54 [1] : vector<8x8xf32> to vector<8xf32>
    %118 = vector.shape_cast %117 : vector<8xf32> to vector<8x1xf32>
    %119 = tpu.reciprocal %118 : vector<8x1xf32> -> vector<8x1xf32>
    %120 = vector.broadcast %119 : vector<8x1xf32> to vector<8x8xf32>
    %121 = arith.mulf %116, %120 : vector<8x8xf32>
    %c0_55 = arith.constant 0 : index
    %c2 = arith.constant 2 : index
    %c0_56 = arith.constant 0 : index
    %c0_57 = arith.constant 0 : index
    %122 = vector.load %arg7[%c0_55, %c2, %c0_56, %c0_57] : memref<1x4x8x8xf32, #tpu.memory_space<vmem>>, vector<1x1x8x8xf32>
    %123 = vector.shape_cast %122 : vector<1x1x8x8xf32> to vector<8x8xf32>
    %124 = vector.shape_cast %121 : vector<8x8xf32> to vector<1x1x8x8xf32>
    tpu.vector_store %arg7[%c0_55, %c2, %c0_56, %c0_57], %124 {strides = array<i32>} : memref<1x4x8x8xf32, #tpu.memory_space<vmem>>, vector<1x1x8x8xf32>,
    %cst_58 = arith.constant dense<0.000000e+00> : vector<8x8xf32>
    %125 = tpu.matmul %121, %108, %cst_58 {dimension_numbers = #tpu.dot_dimension_numbers<[1], [0], [0], [1], [0, 0, 1, 1], [], []>} : vector<8x8xf32>, vector<8x8xf32>, vector<8x8xf32> -> vector<8x8xf32>
    %c0_59 = arith.constant 0 : index
    %c0_60 = arith.constant 0 : index
    %c16 = arith.constant 16 : index
    %126 = vector.load %arg6[%c0_59, %c0_60, %c16] : memref<1x8x32xf32, #tpu.memory_space<vmem>>, vector<1x8x8xf32>
    %127 = vector.shape_cast %126 : vector<1x8x8xf32> to vector<8x8xf32>
    %128 = vector.shape_cast %125 : vector<8x8xf32> to vector<1x8x8xf32>
    tpu.vector_store %arg6[%c0_59, %c0_60, %c16], %128 {strides = array<i32>} : memref<1x8x32xf32, #tpu.memory_space<vmem>>, vector<1x8x8xf32>,
    %129 = vector.extract_strided_slice %25 {offsets = [0, 2], sizes = [8, 1], strides = [1, 1]} : vector<8x4xf32> to vector<8x1xf32>
    %cst_61 = arith.constant 0.398942292 : f32
    %130 = vector.broadcast %cst_61 : f32 to vector<8x1xf32>
    %131 = arith.mulf %130, %129 : vector<8x1xf32>
    %132 = arith.mulf %129, %129 : vector<8x1xf32>
    %133 = vector.broadcast %132 : vector<8x1xf32> to vector<8x8xf32>
    %134 = arith.mulf %35, %133 : vector<8x8xf32>
    %135 = math.exp %134 : vector<8x8xf32>
    %136 = vector.broadcast %131 : vector<8x1xf32> to vector<8x8xf32>
    %137 = arith.mulf %136, %135 : vector<8x8xf32>
    %c0_62 = arith.constant 0 : index
    %c2_63 = arith.constant 2 : index
    %c0_64 = arith.constant 0 : index
    %c0_65 = arith.constant 0 : index
    %138 = vector.load %arg8[%c0_62, %c2_63, %c0_64, %c0_65] : memref<1x4x8x8xf32, #tpu.memory_space<vmem>>, vector<1x1x8x8xf32>
    %139 = vector.shape_cast %138 : vector<1x1x8x8xf32> to vector<8x8xf32>
    %140 = vector.shape_cast %137 : vector<8x8xf32> to vector<1x1x8x8xf32>
    tpu.vector_store %arg8[%c0_62, %c2_63, %c0_64, %c0_65], %140 {strides = array<i32>} : memref<1x4x8x8xf32, #tpu.memory_space<vmem>>, vector<1x1x8x8xf32>,
    %141 = vector.extract_strided_slice %1 {offsets = [0, 24], sizes = [8, 8], strides = [1, 1]} : vector<8x32xf32> to vector<8x8xf32>
    %142 = vector.extract_strided_slice %3 {offsets = [0, 24], sizes = [8, 8], strides = [1, 1]} : vector<8x32xf32> to vector<8x8xf32>
    %143 = vector.extract_strided_slice %5 {offsets = [0, 24], sizes = [8, 8], strides = [1, 1]} : vector<8x32xf32> to vector<8x8xf32>
    %cst_66 = arith.constant dense<0.000000e+00> : vector<8x8xf32>
    %144 = tpu.matmul %141, %142, %cst_66 {dimension_numbers = #tpu.dot_dimension_numbers<[1], [1], [0], [0], [0, 0, 1, 0], [], []>} : vector<8x8xf32>, vector<8x8xf32>, vector<8x8xf32> -> vector<8x8xf32>
    %cst_67 = arith.constant 0.353553385 : f32
    %145 = vector.broadcast %cst_67 : f32 to vector<8x8xf32>
    %146 = arith.mulf %145, %144 : vector<8x8xf32>
    %cst_68 = arith.constant dense<0xFF800000> : vector<8xf32>
    %147 = vector.multi_reduction <maximumf>, %146, %cst_68 [1] : vector<8x8xf32> to vector<8xf32>
    %148 = vector.shape_cast %147 : vector<8xf32> to vector<8x1xf32>
    %149 = vector.broadcast %148 : vector<8x1xf32> to vector<8x8xf32>
    %150 = arith.subf %146, %149 : vector<8x8xf32>
    %151 = math.exp %150 : vector<8x8xf32>
    %cst_69 = arith.constant dense<0.000000e+00> : vector<8xf32>
    %152 = vector.multi_reduction <add>, %151, %cst_69 [1] : vector<8x8xf32> to vector<8xf32>
    %153 = vector.shape_cast %152 : vector<8xf32> to vector<8x1xf32>
    %154 = tpu.reciprocal %153 : vector<8x1xf32> -> vector<8x1xf32>
    %155 = vector.broadcast %154 : vector<8x1xf32> to vector<8x8xf32>
    %156 = arith.mulf %151, %155 : vector<8x8xf32>
    %c0_70 = arith.constant 0 : index
    %c3 = arith.constant 3 : index
    %c0_71 = arith.constant 0 : index
    %c0_72 = arith.constant 0 : index
    %157 = vector.load %arg7[%c0_70, %c3, %c0_71, %c0_72] : memref<1x4x8x8xf32, #tpu.memory_space<vmem>>, vector<1x1x8x8xf32>
    %158 = vector.shape_cast %157 : vector<1x1x8x8xf32> to vector<8x8xf32>
    %159 = vector.shape_cast %156 : vector<8x8xf32> to vector<1x1x8x8xf32>
    tpu.vector_store %arg7[%c0_70, %c3, %c0_71, %c0_72], %159 {strides = array<i32>} : memref<1x4x8x8xf32, #tpu.memory_space<vmem>>, vector<1x1x8x8xf32>,
    %cst_73 = arith.constant dense<0.000000e+00> : vector<8x8xf32>
    %160 = tpu.matmul %156, %143, %cst_73 {dimension_numbers = #tpu.dot_dimension_numbers<[1], [0], [0], [1], [0, 0, 1, 1], [], []>} : vector<8x8xf32>, vector<8x8xf32>, vector<8x8xf32> -> vector<8x8xf32>
    %c0_74 = arith.constant 0 : index
    %c0_75 = arith.constant 0 : index
    %c24 = arith.constant 24 : index
    %161 = vector.load %arg6[%c0_74, %c0_75, %c24] : memref<1x8x32xf32, #tpu.memory_space<vmem>>, vector<1x8x8xf32>
    %162 = vector.shape_cast %161 : vector<1x8x8xf32> to vector<8x8xf32>
    %163 = vector.shape_cast %160 : vector<8x8xf32> to vector<1x8x8xf32>
    tpu.vector_store %arg6[%c0_74, %c0_75, %c24], %163 {strides = array<i32>} : memref<1x8x32xf32, #tpu.memory_space<vmem>>, vector<1x8x8xf32>,
    %164 = vector.extract_strided_slice %25 {offsets = [0, 3], sizes = [8, 1], strides = [1, 1]} : vector<8x4xf32> to vector<8x1xf32>
    %cst_76 = arith.constant 0.398942292 : f32
    %165 = vector.broadcast %cst_76 : f32 to vector<8x1xf32>
    %166 = arith.mulf %165, %164 : vector<8x1xf32>
    %167 = arith.mulf %164, %164 : vector<8x1xf32>
    %168 = vector.broadcast %167 : vector<8x1xf32> to vector<8x8xf32>
    %169 = arith.mulf %35, %168 : vector<8x8xf32>
    %170 = math.exp %169 : vector<8x8xf32>
    %171 = vector.broadcast %166 : vector<8x1xf32> to vector<8x8xf32>
    %172 = arith.mulf %171, %170 : vector<8x8xf32>
    %c0_77 = arith.constant 0 : index
    %c3_78 = arith.constant 3 : index
    %c0_79 = arith.constant 0 : index
    %c0_80 = arith.constant 0 : index
    %173 = vector.load %arg8[%c0_77, %c3_78, %c0_79, %c0_80] : memref<1x4x8x8xf32, #tpu.memory_space<vmem>>, vector<1x1x8x8xf32>
    %174 = vector.shape_cast %173 : vector<1x1x8x8xf32> to vector<8x8xf32>
    %175 = vector.shape_cast %172 : vector<8x8xf32> to vector<1x1x8x8xf32>
    tpu.vector_store %arg8[%c0_77, %c3_78, %c0_79, %c0_80], %175 {strides = array<i32>} : memref<1x4x8x8xf32, #tpu.memory_space<vmem>>, vector<1x1x8x8xf32>,
    return
  }
  func.func @transform_0(%arg0: i32, %arg1: i32) -> (i32, i32, i32) {
    %c0_i32 = arith.constant 0 : i32
    %c0_i32_0 = arith.constant 0 : i32
    return %arg0, %arg1, %c0_i32 : i32, i32, i32
  }
  func.func @transform_1(%arg0: i32, %arg1: i32) -> (i32, i32, i32) {
    %c0_i32 = arith.constant 0 : i32
    %c0_i32_0 = arith.constant 0 : i32
    %c0_i32_1 = arith.constant 0 : i32
    return %arg0, %c0_i32, %c0_i32_0 : i32, i32, i32
  }
  func.func @transform_2(%arg0: i32, %arg1: i32) -> (i32, i32, i32) {
    %c0_i32 = arith.constant 0 : i32
    %c0_i32_0 = arith.constant 0 : i32
    %c0_i32_1 = arith.constant 0 : i32
    return %arg0, %c0_i32, %c0_i32_0 : i32, i32, i32
  }
  func.func @transform_3(%arg0: i32, %arg1: i32) -> (i32, i32, i32) {
    %c0_i32 = arith.constant 0 : i32
    %c0_i32_0 = arith.constant 0 : i32
    return %arg0, %arg1, %c0_i32 : i32, i32, i32
  }
  func.func @transform_4(%arg0: i32, %arg1: i32) -> (i32, i32, i32) {
    %c0_i32 = arith.constant 0 : i32
    %c0_i32_0 = arith.constant 0 : i32
    return %arg0, %arg1, %c0_i32 : i32, i32, i32
  }
  func.func @transform_5(%arg0: i32, %arg1: i32) -> (i32, i32, i32, i32) {
    %c0_i32 = arith.constant 0 : i32
    %c0_i32_0 = arith.constant 0 : i32
    %c0_i32_1 = arith.constant 0 : i32
    return %arg0, %c0_i32, %arg1, %c0_i32_0 : i32, i32, i32, i32
  }
  func.func @transform_6(%arg0: i32, %arg1: i32) -> (i32, i32, i32, i32) {
    %c0_i32 = arith.constant 0 : i32
    %c0_i32_0 = arith.constant 0 : i32
    %c0_i32_1 = arith.constant 0 : i32
    return %arg0, %c0_i32, %arg1, %c0_i32_0 : i32, i32, i32, i32
  }
  func.func @transform_7(%arg0: i32, %arg1: i32) -> (i32, i32, i32) {
    %c0_i32 = arith.constant 0 : i32
    %c0_i32_0 = arith.constant 0 : i32
    return %arg0, %arg1, %c0_i32 : i32, i32, i32
  }
}

</mosaic_0001>

<llo_original>
// kernel: tpu_custom_call.1
$region0: #{tpu_custom_call.1}
  #allocation0 [shape = 'u32[]', space=smem, size = 0x4, offset = 0x4, fixed_abs, tag = 'smem constant byte address 0x4 - core index']
  #allocation1 [shape = 'u32[144,128]{1,0:T(1,128)}', space=vmem, size = 0x12000, scoped, tag = 'internal scratch']
  %s0 = inlined_call_operand.vmem [shape: f32[2,8,32], index: 0, kind: input, shape index: {}]
  %s1 = inlined_call_operand.hbm [shape: f32[2,8,32], index: 1, kind: input, shape index: {}]
  %s2 = inlined_call_operand.hbm [shape: f32[2,8,32], index: 2, kind: input, shape index: {}]
  %s3 = inlined_call_operand.vmem [shape: f32[2,8,4], index: 3, kind: input, shape index: {}]
  %s4 = inlined_call_operand.hbm [shape: f32[2,8,32], index: 4, kind: output, shape index: {0}]
  %s5 = inlined_call_operand.hbm [shape: f32[2,4,8,8], index: 5, kind: output, shape index: {1}]
  %s6 = inlined_call_operand.hbm [shape: f32[2,4,8,8], index: 6, kind: output, shape index: {2}]
  %s7 = inlined_call_operand.vmem [shape: f32[2,8,4], index: 7, kind: output, shape index: {3}]
  %8 = xla_tuple %s4, %s5, %s6, %s7
  %s9 = sld [smem:[#allocation0]]
  $region81: #{tpu_custom_call.1} parent=0
    _
  %s11 = ssub.s32 1, %s9
  %s12 = scalar_select 0, %s11, %s9
  $region1: #{tpu_custom_call.1} parent=0
    #allocation2 [shape = 'u8[8192]{0}', space=vmem, size = 0x2000, scoped, tag = 'input window, operand 1']
    #allocation3 [shape = 's32[2]{0}', space=sflag, size = 0x8, scoped, tag = 'scoped memory for tpu_custom_call.1']
    #allocation4 [shape = 's32[2]{0}', space=sflag, size = 0x8, scoped, tag = 'scoped memory for tpu_custom_call.1']
    #allocation5 [shape = 'u8[8192]{0}', space=vmem, size = 0x2000, scoped, tag = 'input window, operand 2']
    #allocation6 [shape = 's32[2]{0}', space=sflag, size = 0x8, scoped, tag = 'scoped memory for tpu_custom_call.1']
    #allocation7 [shape = 'u8[8192]{0}', space=vmem, size = 0x2000, scoped, tag = 'output window, operand 0']
    #allocation8 [shape = 'u8[32768]{0}', space=vmem, size = 0x8000, scoped, tag = 'output window, operand 1']
    #allocation9 [shape = 's32[2]{0}', space=sflag, size = 0x8, scoped, tag = 'scoped memory for tpu_custom_call.1']
    #allocation10 [shape = 'u8[32768]{0}', space=vmem, size = 0x8000, scoped, tag = 'output window, operand 2']
    %13 = vsyncpa [#allocation3], 0
    %s14 = scalar_lea.sflag [#allocation3], 1
    %15 = vsyncpa %s14, 0
    %16 = vsyncpa [#allocation6], 0
    %s17 = scalar_lea.sflag [#allocation6], 1
    %18 = vsyncpa %s17, 0
    %19 = vsyncpa [#allocation4], 0
    %s20 = scalar_lea.sflag [#allocation4], 1
    %21 = vsyncpa %s20, 0
    %22 = vsyncpa [#allocation9], 0
    %s23 = scalar_lea.sflag [#allocation9], 1
    %24 = vsyncpa %s23, 0
    loop: start=0, step=1, limit=4
    $region2: #{tpu_custom_call.1} parent=1 // loop_pre_header
      _
    $region3: #{tpu_custom_call.1} parent=1 // loop_header
      %s26 = sphi 0, %s30
      %p27 = scmp.ge.s32.totalorder %s26, 4
      %s33 = sphi 0, %s45
      %s34 = sphi 0, %s41
      %s35 = sphi 0, %s33
      %s36 = sphi 0, %s34
      %s37 = sphi 0, %s35
      %s38 = sphi 0, %s36
      %s50 = sphi 0, %s52
      %s53 = sphi 0, %s50
      %s54 = sphi 0, %s53
      %s70 = sphi 0, %s54
      %s76 = sphi 0, %s78
      %s79 = sphi 0, %s76
      %s80 = sphi 0, %s79
      %s96 = sphi 0, %s80
      %s102 = sphi 0, %s104
      %s105 = sphi 0, %s102
      %s106 = sphi 0, %s105
      %s122 = sphi 0, %s106
      %s130 = sphi 0, %s132
      %s133 = sphi 0, %s130
      %s134 = sphi 0, %s133
      %s150 = sphi 0, %s134
      %s158 = sphi 0, %s160
      %s161 = sphi 0, %s158
      %s162 = sphi 0, %s161
      %s178 = sphi 0, %s162
      %s186 = sphi 0, %s188
      %s189 = sphi 0, %s186
      %s190 = sphi 0, %s189
      %s206 = sphi 0, %s190
      %s214 = sphi 0, %s216
      %s217 = sphi 0, %s214
      %s218 = sphi 0, %s217
      %s234 = sphi 0, %s218
      %s242 = sphi 0, %s244
      %s245 = sphi 0, %s242
      %s246 = sphi 0, %s245
      %s262 = sphi 0, %s246
    $region4: #{tpu_custom_call.1} parent=1 // loop_header_branch
      %29 = sbr.rel (%p27) target = $region8
    $region5: #{tpu_custom_call.1} parent=1 // loop_body
      %s31 = ssub.s32 %s26, 1
      %s32 = ssub.s32 %s26, 2
      %s39 = sadd.s32 1, %s34
      %p40 = scmp.ge.s32.totalorder %s39, 1
      %s41 = scalar_select %p40, 0, %s39
      %s42 = sadd.s32 1, %s33
      %s43 = scalar_select %p40, %s42, %s33
      %p44 = scmp.ge.s32.totalorder %s43, 2
      %s45 = scalar_select %p44, 0, %s43
      %s46 = ssub.s32 %s33, %s45
      %s47 = ssub.s32 %s34, %s41
      %s48 = sor.u32 %s46, %s47
      %p49 = scmp.eq.s32.totalorder %s48, 0
      %s51 = sadd.s32 %s50, 1
      %s52 = scalar_select %p49, %s50, %s51
      %p55 = pneg %p49
      %p56 = scmp.eq.s32.totalorder %s26, 1
      %p57 = por %p55, %p56
      %p58 = scmp.ne.s32.totalorder %s50, %s53
      %p59 = scmp.eq.s32.totalorder %s26, 0
      %p60 = por %p58, %p59
      %p61 = scmp.ne.s32.totalorder %s50, %s53
      %p62 = scmp.eq.s32.totalorder %s31, 1
      %p63 = por %p61, %p62
      %p64 = scmp.ne.s32.totalorder %s53, %s54
      %p65 = scmp.eq.s32.totalorder %s31, 0
      %p66 = por %p64, %p65
      %p67 = scmp.ne.s32.totalorder %s53, %s54
      %p68 = scmp.eq.s32.totalorder %s32, 1
      %p69 = por %p67, %p68
      %p71 = scmp.ne.s32.totalorder %s54, %s70
      %p72 = scmp.eq.s32.totalorder %s32, 0
      %p73 = por %p71, %p72
      %s74 = ssub.s32 %s33, %s45
      %p75 = scmp.eq.s32.totalorder %s74, 0
      %s77 = sadd.s32 %s76, 1
      %s78 = scalar_select %p75, %s76, %s77
      %p81 = pneg %p75
      %p82 = scmp.eq.s32.totalorder %s26, 1
      %p83 = por %p81, %p82
      %p84 = scmp.ne.s32.totalorder %s76, %s79
      %p85 = scmp.eq.s32.totalorder %s26, 0
      %p86 = por %p84, %p85
      %p87 = scmp.ne.s32.totalorder %s76, %s79
      %p88 = scmp.eq.s32.totalorder %s31, 1
      %p89 = por %p87, %p88
      %p90 = scmp.ne.s32.totalorder %s79, %s80
      %p91 = scmp.eq.s32.totalorder %s31, 0
      %p92 = por %p90, %p91
      %p93 = scmp.ne.s32.totalorder %s79, %s80
      %p94 = scmp.eq.s32.totalorder %s32, 1
      %p95 = por %p93, %p94
      %p97 = scmp.ne.s32.totalorder %s80, %s96
      %p98 = scmp.eq.s32.totalorder %s32, 0
      %p99 = por %p97, %p98
      %s100 = ssub.s32 %s33, %s45
      %p101 = scmp.eq.s32.totalorder %s100, 0
      %s103 = sadd.s32 %s102, 1
      %s104 = scalar_select %p101, %s102, %s103
      %p107 = pneg %p101
      %p108 = scmp.eq.s32.totalorder %s26, 1
      %p109 = por %p107, %p108
      %p110 = scmp.ne.s32.totalorder %s102, %s105
      %p111 = scmp.eq.s32.totalorder %s26, 0
      %p112 = por %p110, %p111
      %p113 = scmp.ne.s32.totalorder %s102, %s105
      %p114 = scmp.eq.s32.totalorder %s31, 1
      %p115 = por %p113, %p114
      %p116 = scmp.ne.s32.totalorder %s105, %s106
      %p117 = scmp.eq.s32.totalorder %s31, 0
      %p118 = por %p116, %p117
      %p119 = scmp.ne.s32.totalorder %s105, %s106
      %p120 = scmp.eq.s32.totalorder %s32, 1
      %p121 = por %p119, %p120
      %p123 = scmp.ne.s32.totalorder %s106, %s122
      %p124 = scmp.eq.s32.totalorder %s32, 0
      %p125 = por %p123, %p124
      %s126 = ssub.s32 %s33, %s45
      %s127 = ssub.s32 %s34, %s41
      %s128 = sor.u32 %s126, %s127
      %p129 = scmp.eq.s32.totalorder %s128, 0
      %s131 = sadd.s32 %s130, 1
      %s132 = scalar_select %p129, %s130, %s131
      %p135 = pneg %p129
      %p136 = scmp.eq.s32.totalorder %s26, 1
      %p137 = por %p135, %p136
      %p138 = scmp.ne.s32.totalorder %s130, %s133
      %p139 = scmp.eq.s32.totalorder %s26, 0
      %p140 = por %p138, %p139
      %p141 = scmp.ne.s32.totalorder %s130, %s133
      %p142 = scmp.eq.s32.totalorder %s31, 1
      %p143 = por %p141, %p142
      %p144 = scmp.ne.s32.totalorder %s133, %s134
      %p145 = scmp.eq.s32.totalorder %s31, 0
      %p146 = por %p144, %p145
      %p147 = scmp.ne.s32.totalorder %s133, %s134
      %p148 = scmp.eq.s32.totalorder %s32, 1
      %p149 = por %p147, %p148
      %p151 = scmp.ne.s32.totalorder %s134, %s150
      %p152 = scmp.eq.s32.totalorder %s32, 0
      %p153 = por %p151, %p152
      %s154 = ssub.s32 %s33, %s45
      %s155 = ssub.s32 %s34, %s41
      %s156 = sor.u32 %s154, %s155
      %p157 = scmp.eq.s32.totalorder %s156, 0
      %s159 = sadd.s32 %s158, 1
      %s160 = scalar_select %p157, %s158, %s159
      %p163 = pneg %p157
      %p164 = scmp.eq.s32.totalorder %s26, 1
      %p165 = por %p163, %p164
      %p166 = scmp.ne.s32.totalorder %s158, %s161
      %p167 = scmp.eq.s32.totalorder %s26, 0
      %p168 = por %p166, %p167
      %p169 = scmp.ne.s32.totalorder %s158, %s161
      %p170 = scmp.eq.s32.totalorder %s31, 1
      %p171 = por %p169, %p170
      %p172 = scmp.ne.s32.totalorder %s161, %s162
      %p173 = scmp.eq.s32.totalorder %s31, 0
      %p174 = por %p172, %p173
      %p175 = scmp.ne.s32.totalorder %s161, %s162
      %p176 = scmp.eq.s32.totalorder %s32, 1
      %p177 = por %p175, %p176
      %p179 = scmp.ne.s32.totalorder %s162, %s178
      %p180 = scmp.eq.s32.totalorder %s32, 0
      %p181 = por %p179, %p180
      %s182 = ssub.s32 %s33, %s45
      %s183 = ssub.s32 %s34, %s41
      %s184 = sor.u32 %s182, %s183
      %p185 = scmp.eq.s32.totalorder %s184, 0
      %s187 = sadd.s32 %s186, 1
      %s188 = scalar_select %p185, %s186, %s187
      %p191 = pneg %p185
      %p192 = scmp.eq.s32.totalorder %s26, 1
      %p193 = por %p191, %p192
      %p194 = scmp.ne.s32.totalorder %s186, %s189
      %p195 = scmp.eq.s32.totalorder %s26, 0
      %p196 = por %p194, %p195
      %p197 = scmp.ne.s32.totalorder %s186, %s189
      %p198 = scmp.eq.s32.totalorder %s31, 1
      %p199 = por %p197, %p198
      %p200 = scmp.ne.s32.totalorder %s189, %s190
      %p201 = scmp.eq.s32.totalorder %s31, 0
      %p202 = por %p200, %p201
      %p203 = scmp.ne.s32.totalorder %s189, %s190
      %p204 = scmp.eq.s32.totalorder %s32, 1
      %p205 = por %p203, %p204
      %p207 = scmp.ne.s32.totalorder %s190, %s206
      %p208 = scmp.eq.s32.totalorder %s32, 0
      %p209 = por %p207, %p208
      %s210 = ssub.s32 %s33, %s45
      %s211 = ssub.s32 %s34, %s41
      %s212 = sor.u32 %s210, %s211
      %p213 = scmp.eq.s32.totalorder %s212, 0
      %s215 = sadd.s32 %s214, 1
      %s216 = scalar_select %p213, %s214, %s215
      %p219 = pneg %p213
      %p220 = scmp.eq.s32.totalorder %s26, 1
      %p221 = por %p219, %p220
      %p222 = scmp.ne.s32.totalorder %s214, %s217
      %p223 = scmp.eq.s32.totalorder %s26, 0
      %p224 = por %p222, %p223
      %p225 = scmp.ne.s32.totalorder %s214, %s217
      %p226 = scmp.eq.s32.totalorder %s31, 1
      %p227 = por %p225, %p226
      %p228 = scmp.ne.s32.totalorder %s217, %s218
      %p229 = scmp.eq.s32.totalorder %s31, 0
      %p230 = por %p228, %p229
      %p231 = scmp.ne.s32.totalorder %s217, %s218
      %p232 = scmp.eq.s32.totalorder %s32, 1
      %p233 = por %p231, %p232
      %p235 = scmp.ne.s32.totalorder %s218, %s234
      %p236 = scmp.eq.s32.totalorder %s32, 0
      %p237 = por %p235, %p236
      %s238 = ssub.s32 %s33, %s45
      %s239 = ssub.s32 %s34, %s41
      %s240 = sor.u32 %s238, %s239
      %p241 = scmp.eq.s32.totalorder %s240, 0
      %s243 = sadd.s32 %s242, 1
      %s244 = scalar_select %p241, %s242, %s243
      %p247 = pneg %p241
      %p248 = scmp.eq.s32.totalorder %s26, 1
      %p249 = por %p247, %p248
      %p250 = scmp.ne.s32.totalorder %s242, %s245
      %p251 = scmp.eq.s32.totalorder %s26, 0
      %p252 = por %p250, %p251
      %p253 = scmp.ne.s32.totalorder %s242, %s245
      %p254 = scmp.eq.s32.totalorder %s31, 1
      %p255 = por %p253, %p254
      %p256 = scmp.ne.s32.totalorder %s245, %s246
      %p257 = scmp.eq.s32.totalorder %s31, 0
      %p258 = por %p256, %p257
      %p259 = scmp.ne.s32.totalorder %s245, %s246
      %p260 = scmp.eq.s32.totalorder %s32, 1
      %p261 = por %p259, %p260
      %p263 = scmp.ne.s32.totalorder %s246, %s262
      %p264 = scmp.eq.s32.totalorder %s32, 0
      %p265 = por %p263, %p264
      %p266 = scmp.le.s32.totalorder 1, %s26
      %p267 = scmp.lt.s32.totalorder %s26, 3
      %p268 = pnand %p266, %p267
      %p269 = pneg %p268
      // Predicated region
      $region9: #{tpu_custom_call.1} parent=5 // pred_check
        _
      $region10: #{tpu_custom_call.1} parent=5 // pred_check_branch
        %271 = sbr.rel (%p268) target = $region12
      $region11: #{tpu_custom_call.1} parent=5 // pred_region
        %s272 = ssub.s32 %s26, 1
      $region12: #{tpu_custom_call.1} parent=5 // pred_fallthru
        _
      %p273 = scmp.lt.s32.totalorder %s26, 2
      // Predicated region
      $region13: #{tpu_custom_call.1} parent=5 // pred_check
        %p274 = pneg %p273
      $region14: #{tpu_custom_call.1} parent=5 // pred_check_branch
        %276 = sbr.rel (%p274) target = $region16
      $region15: #{tpu_custom_call.1} parent=5 // pred_region
        // Predicated region
        $region17: #{tpu_custom_call.1} parent=15 // pred_check
          %p277 = pneg %p60
        $region18: #{tpu_custom_call.1} parent=15 // pred_check_branch
          %279 = sbr.rel (%p277) target = $region20
        $region19: #{tpu_custom_call.1} parent=15 // pred_region
          %p280 = scmp.lt.s32.totalorder %s33, 1
          %s281 = scalar_select %p280, %s33, 1
          %p282 = scmp.lt.s32.totalorder %s34, 0
          %s283 = scalar_select %p282, %s34, 0
          %s284 = sadd.s32 %s283, %s281
          %s285 = smul.addr %s284, 8
          %s286 = scalar_lea.vmem %s0, %s285
        $region20: #{tpu_custom_call.1} parent=15 // pred_fallthru
          _
        // Predicated region
        $region21: #{tpu_custom_call.1} parent=15 // pred_check
          %p287 = pneg %p86
        $region22: #{tpu_custom_call.1} parent=15 // pred_check_branch
          %289 = sbr.rel (%p287) target = $region24
        $region23: #{tpu_custom_call.1} parent=15 // pred_region
          %s290 = sand.u32 %s76, 1
          %s291 = scalar_lea.sflag [#allocation3], %s290
          %s292 = sand.u32 %s76, 1
          %s293 = smul.addr %s292, 8
          %s294 = scalar_lea.vmem [#allocation2], %s293
          %s296 = ssub.s32 128, 128
          %297 = vsyncadd %s291, %s296
          %s298 = smul.addr %s33, 128
          %s299 = scalar_lea.hbm %s1, %s298
          %s301 = sshll.u32 %s294, 4
          %s302 = int_to_ptr.vmem [resolvable:$true] %s301
          %304 = dma.hbm_to_vmem [thread:$0]  %s299, 128, %s302, %s291
        $region24: #{tpu_custom_call.1} parent=15 // pred_fallthru
          _
        // Predicated region
        $region25: #{tpu_custom_call.1} parent=15 // pred_check
          %p305 = pneg %p112
        $region26: #{tpu_custom_call.1} parent=15 // pred_check_branch
          %307 = sbr.rel (%p305) target = $region28
        $region27: #{tpu_custom_call.1} parent=15 // pred_region
          %s308 = sand.u32 %s102, 1
          %s309 = scalar_lea.sflag [#allocation6], %s308
          %s310 = sand.u32 %s102, 1
          %s311 = smul.addr %s310, 8
          %s312 = scalar_lea.vmem [#allocation5], %s311
          %s314 = ssub.s32 128, 128
          %315 = vsyncadd %s309, %s314
          %s316 = smul.addr %s33, 128
          %s317 = scalar_lea.hbm %s2, %s316
          %s319 = sshll.u32 %s312, 4
          %s320 = int_to_ptr.vmem [resolvable:$true] %s319
          %322 = dma.hbm_to_vmem [thread:$0]  %s317, 128, %s320, %s309
        $region28: #{tpu_custom_call.1} parent=15 // pred_fallthru
          _
        // Predicated region
        $region29: #{tpu_custom_call.1} parent=15 // pred_check
          %p323 = pneg %p140
        $region30: #{tpu_custom_call.1} parent=15 // pred_check_branch
          %325 = sbr.rel (%p323) target = $region32
        $region31: #{tpu_custom_call.1} parent=15 // pred_region
          %p326 = scmp.lt.s32.totalorder %s33, 1
          %s327 = scalar_select %p326, %s33, 1
          %p328 = scmp.lt.s32.totalorder %s34, 0
          %s329 = scalar_select %p328, %s34, 0
          %s330 = sadd.s32 %s329, %s327
          %s331 = smul.addr %s330, 8
          %s332 = scalar_lea.vmem %s3, %s331
        $region32: #{tpu_custom_call.1} parent=15 // pred_fallthru
          _
      $region16: #{tpu_custom_call.1} parent=5 // pred_fallthru
        _
      %p333 = scmp.le.s32.totalorder 1, %s26
      %p334 = scmp.lt.s32.totalorder %s26, 3
      %p335 = pnand %p333, %p334
      %p336 = pneg %p335
      // Predicated region
      $region33: #{tpu_custom_call.1} parent=5 // pred_check
        _
      $region34: #{tpu_custom_call.1} parent=5 // pred_check_branch
        %338 = sbr.rel (%p335) target = $region36
      $region35: #{tpu_custom_call.1} parent=5 // pred_region
        %s339 = ssub.s32 %s26, 1
        %s340 = sand.u32 %s79, 1
        %s341 = scalar_lea.sflag [#allocation3], %s340
        %s342 = sand.u32 %s79, 1
        %s343 = smul.addr %s342, 8
        %s344 = scalar_lea.vmem [#allocation2], %s343
        // Predicated region
        $region37: #{tpu_custom_call.1} parent=35 // pred_check
          %p345 = pneg %p92
        $region38: #{tpu_custom_call.1} parent=35 // pred_check_branch
          %347 = sbr.rel (%p345) target = $region40
        $region39: #{tpu_custom_call.1} parent=35 // pred_region
          %348 = dma.done %s341, 128
        $region40: #{tpu_custom_call.1} parent=35 // pred_fallthru
          _
        %s349 = sand.u32 %s105, 1
        %s350 = scalar_lea.sflag [#allocation6], %s349
        %s351 = sand.u32 %s105, 1
        %s352 = smul.addr %s351, 8
        %s353 = scalar_lea.vmem [#allocation5], %s352
        // Predicated region
        $region41: #{tpu_custom_call.1} parent=35 // pred_check
          %p354 = pneg %p118
        $region42: #{tpu_custom_call.1} parent=35 // pred_check_branch
          %356 = sbr.rel (%p354) target = $region44
        $region43: #{tpu_custom_call.1} parent=35 // pred_region
          %357 = dma.done %s350, 128
        $region44: #{tpu_custom_call.1} parent=35 // pred_fallthru
          _
        %p358 = scmp.lt.s32.totalorder %s35, 1
        %s359 = scalar_select %p358, %s35, 1
        %p360 = scmp.lt.s32.totalorder %s36, 0
        %s361 = scalar_select %p360, %s36, 0
        %s362 = sadd.s32 %s361, %s359
        %s363 = smul.addr %s362, 8
        %s364 = scalar_lea.vmem %s0, %s363
        %p365 = pneg %p66
        %p366 = pneg %p63
        %s367 = sand.u32 %s79, 1
        %s368 = scalar_lea.sflag [#allocation3], %s367
        %s369 = sand.u32 %s79, 1
        %s370 = smul.addr %s369, 8
        %s371 = scalar_lea.vmem [#allocation2], %s370
        %p372 = pneg %p92
        %p373 = pneg %p89
        %s374 = sand.u32 %s105, 1
        %s375 = scalar_lea.sflag [#allocation6], %s374
        %s376 = sand.u32 %s105, 1
        %s377 = smul.addr %s376, 8
        %s378 = scalar_lea.vmem [#allocation5], %s377
        %p379 = pneg %p118
        %p380 = pneg %p115
        %p381 = scmp.lt.s32.totalorder %s35, 1
        %s382 = scalar_select %p381, %s35, 1
        %p383 = scmp.lt.s32.totalorder %s36, 0
        %s384 = scalar_select %p383, %s36, 0
        %s385 = sadd.s32 %s384, %s382
        %s386 = smul.addr %s385, 8
        %s387 = scalar_lea.vmem %s3, %s386
        %p388 = pneg %p146
        %p389 = pneg %p143
        %p390 = pneg %p174
        %p391 = pneg %p171
        %s392 = sand.u32 %s161, 1
        %s393 = scalar_lea.sflag [#allocation4], %s392
        %s394 = sand.u32 %s161, 1
        %s395 = smul.addr %s394, 8
        %s396 = scalar_lea.vmem [#allocation7], %s395
        %p397 = pneg %p202
        %p398 = pneg %p199
        %s399 = sand.u32 %s31, 1
        %s400 = scalar_lea.sflag [#allocation9], %s399
        %s401 = sand.u32 %s189, 1
        %s402 = smul.addr %s401, 32
        %s403 = scalar_lea.vmem [#allocation8], %s402
        %p404 = pneg %p230
        %p405 = pneg %p227
        %s406 = sand.u32 %s31, 1
        %s407 = scalar_lea.sflag [#allocation9], %s406
        %s408 = sand.u32 %s217, 1
        %s409 = smul.addr %s408, 32
        %s410 = scalar_lea.vmem [#allocation10], %s409
        %p411 = pneg %p258
        %p412 = pneg %p255
        %p413 = scmp.lt.s32.totalorder %s35, 1
        %s414 = scalar_select %p413, %s35, 1
        %p415 = scmp.lt.s32.totalorder %s36, 0
        %s416 = scalar_select %p415, %s36, 0
        %s417 = sadd.s32 %s416, %s414
        %s418 = smul.addr %s417, 8
        %s419 = scalar_lea.vmem %s7, %s418
        %p420 = scmp.lt.s32.totalorder %s35, 1
        %s421 = scalar_select %p420, %s35, 1
        %p422 = scmp.lt.s32.totalorder %s36, 0
        %s423 = scalar_select %p422, %s36, 0
        %s424 = sadd.s32 %s423, %s421
        %s425 = smul.addr %s424, 8
        %s426 = scalar_lea.vmem %s0, %s425
        %p427 = scmp.lt.s32.totalorder %s35, 1
        %s428 = scalar_select %p427, %s35, 1
        %p429 = scmp.lt.s32.totalorder %s36, 0
        %s430 = scalar_select %p429, %s36, 0
        %s431 = sadd.s32 %s430, %s428
        %s432 = smul.addr %s431, 8
        %s433 = scalar_lea.vmem %s3, %s432
        %p434 = scmp.lt.s32.totalorder %s35, 1
        %s435 = scalar_select %p434, %s35, 1
        %p436 = scmp.lt.s32.totalorder %s36, 0
        %s437 = scalar_select %p436, %s36, 0
        %s438 = sadd.s32 %s437, %s435
        %s439 = smul.addr %s438, 8
        %s440 = scalar_lea.vmem %s7, %s439
        %v441 = vld [vmem:[%s426] sm:$0xff]
        %v442 = vld [vmem:[%s344] sm:$0xff]
        %v443 = vld [vmem:[%s353] sm:$0xff]
        %v444 = vld [vmem:[%s433] sm:$0xff]
        %v445 = vmul.f32 %v444, 5.0
        %v446 = vxor.u32 %v445, 2147483648
        %v447 = vmul.f32 %v446, 1.442695
        %v448 = vpow.pop %v447
        %v449 = vadd.f32 %v448, 1.0
        %v450 = vrcp.pop %v449
        %v451 = vmul.f32 1.0, %v450
        %v452 = vadd.f32 %v451, 1e-05
        %v453 = vmul.f32 %v452, 1.0986123
        %v454 = vmul.f32 %v453, 1.442695
        %v455 = vpow.pop %v454
        %v456 = vsub.f32 %v455, 1.0
        %vm457 = vcmask 31744
        %458 = vst.msk [vmem:[%s440] sm:$0xff] %vm457, %v456
        %v459 = vrcp.pop %v456
        %s460 = smul.u32 %s36, 8
        %v461 = vlaneseq
        %v462 = vshrl.u32 %v461, 7
        %v463 = vstv %s460
        %v464 = vadd.s32 %v463, %v462
        %v465 = vlaneseq
        %v466 = vand.u32 %v465, 127
        %v467 = vsub.s32 %v464, %v466
        %v468 = vcvt.s32.f32 %v467
        %v469 = vmul.f32 %v468, -0.5
        %v470 = vmul.f32 %v469, %v468
        %vm471 = vcmask 64512
        %v473 = vsel %vm471, %v441, 0
        %v476 = vsel %vm471, %v442, 0
        %478 = vmatprep.subr.mxu0 0.0
        %479 = vmatpush1.xpose.msra.mxu0 %v476
        %480 = vmatprep.subr.mxu0 0.0
        %481 = vmatpush1.xpose.msra.mxu0 0.0
        %482 = vmatprep.subr.mxu0 0.0
        %483 = vmatpush1.xpose.msra.mxu0 0.0
        %484 = vmatprep.subr.mxu0 0.0
        %485 = vmatpush1.xpose.msra.mxu0 0.0
        %486 = vmatprep.subr.mxu0 0.0
        %487 = vmatpush1.xpose.msra.mxu0 0.0
        %488 = vmatprep.subr.mxu0 0.0
        %489 = vmatpush1.xpose.msra.mxu0 0.0
        %490 = vmatprep.subr.mxu0 0.0
        %491 = vmatpush1.xpose.msra.mxu0 0.0
        %492 = vmatprep.subr.mxu0 0.0
        %493 = vmatpush1.xpose.msra.mxu0 0.0
        %494 = vmatprep.subr.mxu0 0.0
        %495 = vmatpush1.xpose.msra.mxu0 0.0
        %496 = vmatprep.subr.mxu0 0.0
        %497 = vmatpush1.xpose.msra.mxu0 0.0
        %498 = vmatprep.subr.mxu0 0.0
        %499 = vmatpush1.xpose.msra.mxu0 0.0
        %500 = vmatprep.subr.mxu0 0.0
        %501 = vmatpush1.xpose.msra.mxu0 0.0
        %502 = vmatprep.subr.mxu0 0.0
        %503 = vmatpush1.xpose.msra.mxu0 0.0
        %504 = vmatprep.subr.mxu0 0.0
        %505 = vmatpush1.xpose.msra.mxu0 0.0
        %506 = vmatprep.subr.mxu0 0.0
        %507 = vmatpush1.xpose.msra.mxu0 0.0
        %508 = vmatprep.subr.mxu0 0.0
        %509 = vmatpush1.xpose.msra.mxu0 0.0
        %510 = vmatprep.subr.mxu0 0.0
        %511 = vmatpush1.xpose.msra.mxu0 0.0
        %512 = vmatprep.subr.mxu0 0.0
        %513 = vmatpush1.xpose.msra.mxu0 0.0
        %514 = vmatprep.subr.mxu0 0.0
        %515 = vmatpush1.xpose.msra.mxu0 0.0
        %516 = vmatprep.subr.mxu0 0.0
        %517 = vmatpush1.xpose.msra.mxu0 0.0
        %518 = vmatprep.subr.mxu0 0.0
        %519 = vmatpush1.xpose.msra.mxu0 0.0
        %520 = vmatprep.subr.mxu0 0.0
        %521 = vmatpush1.xpose.msra.mxu0 0.0
        %522 = vmatprep.subr.mxu0 0.0
        %523 = vmatpush1.xpose.msra.mxu0 0.0
        %524 = vmatprep.subr.mxu0 0.0
        %525 = vmatpush1.xpose.msra.mxu0 0.0
        %526 = vmatprep.subr.mxu0 0.0
        %527 = vmatpush1.xpose.msra.mxu0 0.0
        %528 = vmatprep.subr.mxu0 0.0
        %529 = vmatpush1.xpose.msra.mxu0 0.0
        %530 = vmatprep.subr.mxu0 0.0
        %531 = vmatpush1.xpose.msra.mxu0 0.0
        %532 = vmatprep.subr.mxu0 0.0
        %533 = vmatpush1.xpose.msra.mxu0 0.0
        %534 = vmatprep.subr.mxu0 0.0
        %535 = vmatpush1.xpose.msra.mxu0 0.0
        %536 = vmatprep.subr.mxu0 0.0
        %537 = vmatpush1.xpose.msra.mxu0 0.0
        %538 = vmatprep.subr.mxu0 0.0
        %539 = vmatpush1.xpose.msra.mxu0 0.0
        %540 = vmatprep.subr.mxu0 0.0
        %541 = vmatpush1.xpose.msra.mxu0 0.0
        %542 = vmatprep.mubr.f32.mxu0 0.0
        %543 = vmatmul.mubr.f32.gmra.mrb[0].mxu0 %v473
        %v544 = vpop.f32.mrb[0].mxu0
        %v545 = vadd.f32 0.0, %v544
        %v546 = vpop.f32.mrb[0].mxu0
        %547 = vdwg.mxu0
        %v548 = vmul.f32 %v545, 0.35355338
        %v549 = vsel %vm471, %v548, -inf
        %550 = vmax.xlane.f32.xlu0 %v549
        %v551 = vpop.xlane.xlu0 %550
        %v552 = vsub.f32 %v548, %v551
        %v553 = vmul.f32 %v552, 1.442695
        %v554 = vpow.pop %v553
        %v555 = vsel %vm471, %v554, 0.0
        %556 = vadd.xlane.f32.xlu0 %v555
        %v557 = vpop.xlane.xlu0 %556
        %v558 = vrcp.pop %v557
        %v559 = vmul.f32 %v554, %v558
        %560 = vst.msk [vmem:[%s403] sm:$0xff] %vm471, %v559
        %v562 = vsel %vm471, %v559, 0
        %564 = vmatprep.subr.mxu0 0.0
        %565 = vmatpush1.msra.mxu0 %v443
        %566 = vmatprep.subr.mxu0 0.0
        %567 = vmatpush1.msra.mxu0 0.0
        %568 = vmatprep.subr.mxu0 0.0
        %569 = vmatpush1.msra.mxu0 0.0
        %570 = vmatprep.subr.mxu0 0.0
        %571 = vmatpush1.msra.mxu0 0.0
        %572 = vmatprep.subr.mxu0 0.0
        %573 = vmatpush1.msra.mxu0 0.0
        %574 = vmatprep.subr.mxu0 0.0
        %575 = vmatpush1.msra.mxu0 0.0
        %576 = vmatprep.subr.mxu0 0.0
        %577 = vmatpush1.msra.mxu0 0.0
        %578 = vmatprep.subr.mxu0 0.0
        %579 = vmatpush1.msra.mxu0 0.0
        %580 = vmatprep.subr.mxu0 0.0
        %581 = vmatpush1.msra.mxu0 0.0
        %582 = vmatprep.subr.mxu0 0.0
        %583 = vmatpush1.msra.mxu0 0.0
        %584 = vmatprep.subr.mxu0 0.0
        %585 = vmatpush1.msra.mxu0 0.0
        %586 = vmatprep.subr.mxu0 0.0
        %587 = vmatpush1.msra.mxu0 0.0
        %588 = vmatprep.subr.mxu0 0.0
        %589 = vmatpush1.msra.mxu0 0.0
        %590 = vmatprep.subr.mxu0 0.0
        %591 = vmatpush1.msra.mxu0 0.0
        %592 = vmatprep.subr.mxu0 0.0
        %593 = vmatpush1.msra.mxu0 0.0
        %594 = vmatprep.subr.mxu0 0.0
        %595 = vmatpush1.msra.mxu0 0.0
        %596 = vmatprep.subr.mxu0 0.0
        %597 = vmatpush1.msra.mxu0 0.0
        %598 = vmatprep.subr.mxu0 0.0
        %599 = vmatpush1.msra.mxu0 0.0
        %600 = vmatprep.subr.mxu0 0.0
        %601 = vmatpush1.msra.mxu0 0.0
        %602 = vmatprep.subr.mxu0 0.0
        %603 = vmatpush1.msra.mxu0 0.0
        %604 = vmatprep.subr.mxu0 0.0
        %605 = vmatpush1.msra.mxu0 0.0
        %606 = vmatprep.subr.mxu0 0.0
        %607 = vmatpush1.msra.mxu0 0.0
        %608 = vmatprep.subr.mxu0 0.0
        %609 = vmatpush1.msra.mxu0 0.0
        %610 = vmatprep.subr.mxu0 0.0
        %611 = vmatpush1.msra.mxu0 0.0
        %612 = vmatprep.subr.mxu0 0.0
        %613 = vmatpush1.msra.mxu0 0.0
        %614 = vmatprep.subr.mxu0 0.0
        %615 = vmatpush1.msra.mxu0 0.0
        %616 = vmatprep.subr.mxu0 0.0
        %617 = vmatpush1.msra.mxu0 0.0
        %618 = vmatprep.subr.mxu0 0.0
        %619 = vmatpush1.msra.mxu0 0.0
        %620 = vmatprep.subr.mxu0 0.0
        %621 = vmatpush1.msra.mxu0 0.0
        %622 = vmatprep.subr.mxu0 0.0
        %623 = vmatpush1.msra.mxu0 0.0
        %624 = vmatprep.subr.mxu0 0.0
        %625 = vmatpush1.msra.mxu0 0.0
        %626 = vmatprep.subr.mxu0 0.0
        %627 = vmatpush1.msra.mxu0 0.0
        %628 = vmatprep.mubr.f32.mxu0 0.0
        %629 = vmatmul.mubr.f32.gmra.mrb[0].mxu0 %v562
        %v630 = vpop.f32.mrb[0].mxu0
        %v631 = vadd.f32 0.0, %v630
        %v632 = vpop.f32.mrb[0].mxu0
        %633 = vdwg.mxu0
        %634 = vst.msk [vmem:[%s396] sm:$0xff] %vm471, %v631
        %v635 = vmul.f32 %v459, 0.3989423
        %v636 = vmul.f32 %v459, %v459
        %638 = vset.pattern.permute.xlu0 0
        %639 = vperm.xlu0 %638, %v636
        %v640 = vpop.permute.xlu0 %639
        %v642 = vmul.f32 %v470, %v640
        %v643 = vmul.f32 %v642, 1.442695
        %v644 = vpow.pop %v643
        %646 = vset.pattern.permute.xlu0 0
        %647 = vperm.xlu0 %646, %v635
        %v648 = vpop.permute.xlu0 %647
        %v650 = vmul.f32 %v648, %v644
        %651 = vst.msk [vmem:[%s410] sm:$0xff] %vm471, %v650
        %652 = vrot.lane.b32.xlu0 %v441, 120
        %v653 = vpop.permute.xlu0 %652
        %654 = vrot.lane.b32.xlu0 %v442, 120
        %v655 = vpop.permute.xlu0 %654
        %v656 = vsel %vm471, %v653, 0
        %v658 = vsel %vm471, %v655, 0
        %660 = vmatprep.subr.mxu0 0.0
        %661 = vmatpush1.xpose.msra.mxu0 %v658
        %662 = vmatprep.subr.mxu0 0.0
        %663 = vmatpush1.xpose.msra.mxu0 0.0
        %664 = vmatprep.subr.mxu0 0.0
        %665 = vmatpush1.xpose.msra.mxu0 0.0
        %666 = vmatprep.subr.mxu0 0.0
        %667 = vmatpush1.xpose.msra.mxu0 0.0
        %668 = vmatprep.subr.mxu0 0.0
        %669 = vmatpush1.xpose.msra.mxu0 0.0
        %670 = vmatprep.subr.mxu0 0.0
        %671 = vmatpush1.xpose.msra.mxu0 0.0
        %672 = vmatprep.subr.mxu0 0.0
        %673 = vmatpush1.xpose.msra.mxu0 0.0
        %674 = vmatprep.subr.mxu0 0.0
        %675 = vmatpush1.xpose.msra.mxu0 0.0
        %676 = vmatprep.subr.mxu0 0.0
        %677 = vmatpush1.xpose.msra.mxu0 0.0
        %678 = vmatprep.subr.mxu0 0.0
        %679 = vmatpush1.xpose.msra.mxu0 0.0
        %680 = vmatprep.subr.mxu0 0.0
        %681 = vmatpush1.xpose.msra.mxu0 0.0
        %682 = vmatprep.subr.mxu0 0.0
        %683 = vmatpush1.xpose.msra.mxu0 0.0
        %684 = vmatprep.subr.mxu0 0.0
        %685 = vmatpush1.xpose.msra.mxu0 0.0
        %686 = vmatprep.subr.mxu0 0.0
        %687 = vmatpush1.xpose.msra.mxu0 0.0
        %688 = vmatprep.subr.mxu0 0.0
        %689 = vmatpush1.xpose.msra.mxu0 0.0
        %690 = vmatprep.subr.mxu0 0.0
        %691 = vmatpush1.xpose.msra.mxu0 0.0
        %692 = vmatprep.subr.mxu0 0.0
        %693 = vmatpush1.xpose.msra.mxu0 0.0
        %694 = vmatprep.subr.mxu0 0.0
        %695 = vmatpush1.xpose.msra.mxu0 0.0
        %696 = vmatprep.subr.mxu0 0.0
        %697 = vmatpush1.xpose.msra.mxu0 0.0
        %698 = vmatprep.subr.mxu0 0.0
        %699 = vmatpush1.xpose.msra.mxu0 0.0
        %700 = vmatprep.subr.mxu0 0.0
        %701 = vmatpush1.xpose.msra.mxu0 0.0
        %702 = vmatprep.subr.mxu0 0.0
        %703 = vmatpush1.xpose.msra.mxu0 0.0
        %704 = vmatprep.subr.mxu0 0.0
        %705 = vmatpush1.xpose.msra.mxu0 0.0
        %706 = vmatprep.subr.mxu0 0.0
        %707 = vmatpush1.xpose.msra.mxu0 0.0
        %708 = vmatprep.subr.mxu0 0.0
        %709 = vmatpush1.xpose.msra.mxu0 0.0
        %710 = vmatprep.subr.mxu0 0.0
        %711 = vmatpush1.xpose.msra.mxu0 0.0
        %712 = vmatprep.subr.mxu0 0.0
        %713 = vmatpush1.xpose.msra.mxu0 0.0
        %714 = vmatprep.subr.mxu0 0.0
        %715 = vmatpush1.xpose.msra.mxu0 0.0
        %716 = vmatprep.subr.mxu0 0.0
        %717 = vmatpush1.xpose.msra.mxu0 0.0
        %718 = vmatprep.subr.mxu0 0.0
        %719 = vmatpush1.xpose.msra.mxu0 0.0
        %720 = vmatprep.subr.mxu0 0.0
        %721 = vmatpush1.xpose.msra.mxu0 0.0
        %722 = vmatprep.subr.mxu0 0.0
        %723 = vmatpush1.xpose.msra.mxu0 0.0
        %724 = vmatprep.mubr.f32.mxu0 0.0
        %725 = vmatmul.mubr.f32.gmra.mrb[0].mxu0 %v656
        %v726 = vpop.f32.mrb[0].mxu0
        %v727 = vadd.f32 0.0, %v726
        %v728 = vpop.f32.mrb[0].mxu0
        %729 = vdwg.mxu0
        %v730 = vmul.f32 %v727, 0.35355338
        %v731 = vsel %vm471, %v730, -inf
        %732 = vmax.xlane.f32.xlu0 %v731
        %v733 = vpop.xlane.xlu0 %732
        %v734 = vsub.f32 %v730, %v733
        %v735 = vmul.f32 %v734, 1.442695
        %v736 = vpow.pop %v735
        %v737 = vsel %vm471, %v736, 0.0
        %738 = vadd.xlane.f32.xlu0 %v737
        %v739 = vpop.xlane.xlu0 %738
        %v740 = vrcp.pop %v739
        %v741 = vmul.f32 %v736, %v740
        %s742 = scalar_lea.vmem %s403, 8 [#allocation8]
        %743 = vst.msk [vmem:[%s742] sm:$0xff] %vm471, %v741
        %745 = vrot.lane.b32.xlu0 %v443, 120
        %v746 = vpop.permute.xlu0 %745
        %v749 = vsel %vm471, %v741, 0
        %751 = vmatprep.subr.mxu0 0.0
        %752 = vmatpush1.msra.mxu0 %v746
        %753 = vmatprep.subr.mxu0 0.0
        %754 = vmatpush1.msra.mxu0 0.0
        %755 = vmatprep.subr.mxu0 0.0
        %756 = vmatpush1.msra.mxu0 0.0
        %757 = vmatprep.subr.mxu0 0.0
        %758 = vmatpush1.msra.mxu0 0.0
        %759 = vmatprep.subr.mxu0 0.0
        %760 = vmatpush1.msra.mxu0 0.0
        %761 = vmatprep.subr.mxu0 0.0
        %762 = vmatpush1.msra.mxu0 0.0
        %763 = vmatprep.subr.mxu0 0.0
        %764 = vmatpush1.msra.mxu0 0.0
        %765 = vmatprep.subr.mxu0 0.0
        %766 = vmatpush1.msra.mxu0 0.0
        %767 = vmatprep.subr.mxu0 0.0
        %768 = vmatpush1.msra.mxu0 0.0
        %769 = vmatprep.subr.mxu0 0.0
        %770 = vmatpush1.msra.mxu0 0.0
        %771 = vmatprep.subr.mxu0 0.0
        %772 = vmatpush1.msra.mxu0 0.0
        %773 = vmatprep.subr.mxu0 0.0
        %774 = vmatpush1.msra.mxu0 0.0
        %775 = vmatprep.subr.mxu0 0.0
        %776 = vmatpush1.msra.mxu0 0.0
        %777 = vmatprep.subr.mxu0 0.0
        %778 = vmatpush1.msra.mxu0 0.0
        %779 = vmatprep.subr.mxu0 0.0
        %780 = vmatpush1.msra.mxu0 0.0
        %781 = vmatprep.subr.mxu0 0.0
        %782 = vmatpush1.msra.mxu0 0.0
        %783 = vmatprep.subr.mxu0 0.0
        %784 = vmatpush1.msra.mxu0 0.0
        %785 = vmatprep.subr.mxu0 0.0
        %786 = vmatpush1.msra.mxu0 0.0
        %787 = vmatprep.subr.mxu0 0.0
        %788 = vmatpush1.msra.mxu0 0.0
        %789 = vmatprep.subr.mxu0 0.0
        %790 = vmatpush1.msra.mxu0 0.0
        %791 = vmatprep.subr.mxu0 0.0
        %792 = vmatpush1.msra.mxu0 0.0
        %793 = vmatprep.subr.mxu0 0.0
        %794 = vmatpush1.msra.mxu0 0.0
        %795 = vmatprep.subr.mxu0 0.0
        %796 = vmatpush1.msra.mxu0 0.0
        %797 = vmatprep.subr.mxu0 0.0
        %798 = vmatpush1.msra.mxu0 0.0
        %799 = vmatprep.subr.mxu0 0.0
        %800 = vmatpush1.msra.mxu0 0.0
        %801 = vmatprep.subr.mxu0 0.0
        %802 = vmatpush1.msra.mxu0 0.0
        %803 = vmatprep.subr.mxu0 0.0
        %804 = vmatpush1.msra.mxu0 0.0
        %805 = vmatprep.subr.mxu0 0.0
        %806 = vmatpush1.msra.mxu0 0.0
        %807 = vmatprep.subr.mxu0 0.0
        %808 = vmatpush1.msra.mxu0 0.0
        %809 = vmatprep.subr.mxu0 0.0
        %810 = vmatpush1.msra.mxu0 0.0
        %811 = vmatprep.subr.mxu0 0.0
        %812 = vmatpush1.msra.mxu0 0.0
        %813 = vmatprep.subr.mxu0 0.0
        %814 = vmatpush1.msra.mxu0 0.0
        %815 = vmatprep.mubr.f32.mxu0 0.0
        %816 = vmatmul.mubr.f32.gmra.mrb[0].mxu0 %v749
        %v817 = vpop.f32.mrb[0].mxu0
        %v818 = vadd.f32 0.0, %v817
        %v819 = vpop.f32.mrb[0].mxu0
        %820 = vdwg.mxu0
        %822 = vrot.lane.b32.xlu0 %v818, 8
        %v823 = vpop.permute.xlu0 %822
        %vm825 = vcmask 130112
        %826 = vst.msk [vmem:[%s396] sm:$0xff] %vm825, %v823
        %827 = vset.pattern.permute.xlu0 1
        %828 = vperm.xlu0 %827, %v636
        %v829 = vpop.permute.xlu0 %828
        %v831 = vmul.f32 %v470, %v829
        %v832 = vmul.f32 %v831, 1.442695
        %v833 = vpow.pop %v832
        %834 = vset.pattern.permute.xlu0 1
        %835 = vperm.xlu0 %834, %v635
        %v836 = vpop.permute.xlu0 %835
        %v838 = vmul.f32 %v836, %v833
        %s839 = scalar_lea.vmem %s410, 8 [#allocation10]
        %840 = vst.msk [vmem:[%s839] sm:$0xff] %vm471, %v838
        %841 = vrot.lane.b32.xlu0 %v441, 112
        %v842 = vpop.permute.xlu0 %841
        %843 = vrot.lane.b32.xlu0 %v442, 112
        %v844 = vpop.permute.xlu0 %843
        %v845 = vsel %vm471, %v842, 0
        %v847 = vsel %vm471, %v844, 0
        %849 = vmatprep.subr.mxu0 0.0
        %850 = vmatpush1.xpose.msra.mxu0 %v847
        %851 = vmatprep.subr.mxu0 0.0
        %852 = vmatpush1.xpose.msra.mxu0 0.0
        %853 = vmatprep.subr.mxu0 0.0
        %854 = vmatpush1.xpose.msra.mxu0 0.0
        %855 = vmatprep.subr.mxu0 0.0
        %856 = vmatpush1.xpose.msra.mxu0 0.0
        %857 = vmatprep.subr.mxu0 0.0
        %858 = vmatpush1.xpose.msra.mxu0 0.0
        %859 = vmatprep.subr.mxu0 0.0
        %860 = vmatpush1.xpose.msra.mxu0 0.0
        %861 = vmatprep.subr.mxu0 0.0
        %862 = vmatpush1.xpose.msra.mxu0 0.0
        %863 = vmatprep.subr.mxu0 0.0
        %864 = vmatpush1.xpose.msra.mxu0 0.0
        %865 = vmatprep.subr.mxu0 0.0
        %866 = vmatpush1.xpose.msra.mxu0 0.0
        %867 = vmatprep.subr.mxu0 0.0
        %868 = vmatpush1.xpose.msra.mxu0 0.0
        %869 = vmatprep.subr.mxu0 0.0
        %870 = vmatpush1.xpose.msra.mxu0 0.0
        %871 = vmatprep.subr.mxu0 0.0
        %872 = vmatpush1.xpose.msra.mxu0 0.0
        %873 = vmatprep.subr.mxu0 0.0
        %874 = vmatpush1.xpose.msra.mxu0 0.0
        %875 = vmatprep.subr.mxu0 0.0
        %876 = vmatpush1.xpose.msra.mxu0 0.0
        %877 = vmatprep.subr.mxu0 0.0
        %878 = vmatpush1.xpose.msra.mxu0 0.0
        %879 = vmatprep.subr.mxu0 0.0
        %880 = vmatpush1.xpose.msra.mxu0 0.0
        %881 = vmatprep.subr.mxu0 0.0
        %882 = vmatpush1.xpose.msra.mxu0 0.0
        %883 = vmatprep.subr.mxu0 0.0
        %884 = vmatpush1.xpose.msra.mxu0 0.0
        %885 = vmatprep.subr.mxu0 0.0
        %886 = vmatpush1.xpose.msra.mxu0 0.0
        %887 = vmatprep.subr.mxu0 0.0
        %888 = vmatpush1.xpose.msra.mxu0 0.0
        %889 = vmatprep.subr.mxu0 0.0
        %890 = vmatpush1.xpose.msra.mxu0 0.0
        %891 = vmatprep.subr.mxu0 0.0
        %892 = vmatpush1.xpose.msra.mxu0 0.0
        %893 = vmatprep.subr.mxu0 0.0
        %894 = vmatpush1.xpose.msra.mxu0 0.0
        %895 = vmatprep.subr.mxu0 0.0
        %896 = vmatpush1.xpose.msra.mxu0 0.0
        %897 = vmatprep.subr.mxu0 0.0
        %898 = vmatpush1.xpose.msra.mxu0 0.0
        %899 = vmatprep.subr.mxu0 0.0
        %900 = vmatpush1.xpose.msra.mxu0 0.0
        %901 = vmatprep.subr.mxu0 0.0
        %902 = vmatpush1.xpose.msra.mxu0 0.0
        %903 = vmatprep.subr.mxu0 0.0
        %904 = vmatpush1.xpose.msra.mxu0 0.0
        %905 = vmatprep.subr.mxu0 0.0
        %906 = vmatpush1.xpose.msra.mxu0 0.0
        %907 = vmatprep.subr.mxu0 0.0
        %908 = vmatpush1.xpose.msra.mxu0 0.0
        %909 = vmatprep.subr.mxu0 0.0
        %910 = vmatpush1.xpose.msra.mxu0 0.0
        %911 = vmatprep.subr.mxu0 0.0
        %912 = vmatpush1.xpose.msra.mxu0 0.0
        %913 = vmatprep.mubr.f32.mxu0 0.0
        %914 = vmatmul.mubr.f32.gmra.mrb[0].mxu0 %v845
        %v915 = vpop.f32.mrb[0].mxu0
        %v916 = vadd.f32 0.0, %v915
        %v917 = vpop.f32.mrb[0].mxu0
        %918 = vdwg.mxu0
        %v919 = vmul.f32 %v916, 0.35355338
        %v920 = vsel %vm471, %v919, -inf
        %921 = vmax.xlane.f32.xlu0 %v920
        %v922 = vpop.xlane.xlu0 %921
        %v923 = vsub.f32 %v919, %v922
        %v924 = vmul.f32 %v923, 1.442695
        %v925 = vpow.pop %v924
        %v926 = vsel %vm471, %v925, 0.0
        %927 = vadd.xlane.f32.xlu0 %v926
        %v928 = vpop.xlane.xlu0 %927
        %v929 = vrcp.pop %v928
        %v930 = vmul.f32 %v925, %v929
        %s931 = scalar_lea.vmem %s403, 16 [#allocation8]
        %932 = vst.msk [vmem:[%s931] sm:$0xff] %vm471, %v930
        %933 = vrot.lane.b32.xlu0 %v443, 112
        %v934 = vpop.permute.xlu0 %933
        %v937 = vsel %vm471, %v930, 0
        %939 = vmatprep.subr.mxu0 0.0
        %940 = vmatpush1.msra.mxu0 %v934
        %941 = vmatprep.subr.mxu0 0.0
        %942 = vmatpush1.msra.mxu0 0.0
        %943 = vmatprep.subr.mxu0 0.0
        %944 = vmatpush1.msra.mxu0 0.0
        %945 = vmatprep.subr.mxu0 0.0
        %946 = vmatpush1.msra.mxu0 0.0
        %947 = vmatprep.subr.mxu0 0.0
        %948 = vmatpush1.msra.mxu0 0.0
        %949 = vmatprep.subr.mxu0 0.0
        %950 = vmatpush1.msra.mxu0 0.0
        %951 = vmatprep.subr.mxu0 0.0
        %952 = vmatpush1.msra.mxu0 0.0
        %953 = vmatprep.subr.mxu0 0.0
        %954 = vmatpush1.msra.mxu0 0.0
        %955 = vmatprep.subr.mxu0 0.0
        %956 = vmatpush1.msra.mxu0 0.0
        %957 = vmatprep.subr.mxu0 0.0
        %958 = vmatpush1.msra.mxu0 0.0
        %959 = vmatprep.subr.mxu0 0.0
        %960 = vmatpush1.msra.mxu0 0.0
        %961 = vmatprep.subr.mxu0 0.0
        %962 = vmatpush1.msra.mxu0 0.0
        %963 = vmatprep.subr.mxu0 0.0
        %964 = vmatpush1.msra.mxu0 0.0
        %965 = vmatprep.subr.mxu0 0.0
        %966 = vmatpush1.msra.mxu0 0.0
        %967 = vmatprep.subr.mxu0 0.0
        %968 = vmatpush1.msra.mxu0 0.0
        %969 = vmatprep.subr.mxu0 0.0
        %970 = vmatpush1.msra.mxu0 0.0
        %971 = vmatprep.subr.mxu0 0.0
        %972 = vmatpush1.msra.mxu0 0.0
        %973 = vmatprep.subr.mxu0 0.0
        %974 = vmatpush1.msra.mxu0 0.0
        %975 = vmatprep.subr.mxu0 0.0
        %976 = vmatpush1.msra.mxu0 0.0
        %977 = vmatprep.subr.mxu0 0.0
        %978 = vmatpush1.msra.mxu0 0.0
        %979 = vmatprep.subr.mxu0 0.0
        %980 = vmatpush1.msra.mxu0 0.0
        %981 = vmatprep.subr.mxu0 0.0
        %982 = vmatpush1.msra.mxu0 0.0
        %983 = vmatprep.subr.mxu0 0.0
        %984 = vmatpush1.msra.mxu0 0.0
        %985 = vmatprep.subr.mxu0 0.0
        %986 = vmatpush1.msra.mxu0 0.0
        %987 = vmatprep.subr.mxu0 0.0
        %988 = vmatpush1.msra.mxu0 0.0
        %989 = vmatprep.subr.mxu0 0.0
        %990 = vmatpush1.msra.mxu0 0.0
        %991 = vmatprep.subr.mxu0 0.0
        %992 = vmatpush1.msra.mxu0 0.0
        %993 = vmatprep.subr.mxu0 0.0
        %994 = vmatpush1.msra.mxu0 0.0
        %995 = vmatprep.subr.mxu0 0.0
        %996 = vmatpush1.msra.mxu0 0.0
        %997 = vmatprep.subr.mxu0 0.0
        %998 = vmatpush1.msra.mxu0 0.0
        %999 = vmatprep.subr.mxu0 0.0
        %1000 = vmatpush1.msra.mxu0 0.0
        %1001 = vmatprep.subr.mxu0 0.0
        %1002 = vmatpush1.msra.mxu0 0.0
        %1003 = vmatprep.mubr.f32.mxu0 0.0
        %1004 = vmatmul.mubr.f32.gmra.mrb[0].mxu0 %v937
        %v1005 = vpop.f32.mrb[0].mxu0
        %v1006 = vadd.f32 0.0, %v1005
        %v1007 = vpop.f32.mrb[0].mxu0
        %1008 = vdwg.mxu0
        %1010 = vrot.lane.b32.xlu0 %v1006, 16
        %v1011 = vpop.permute.xlu0 %1010
        %vm1013 = vcmask 195712
        %1014 = vst.msk [vmem:[%s396] sm:$0xff] %vm1013, %v1011
        %1015 = vset.pattern.permute.xlu0 2
        %1016 = vperm.xlu0 %1015, %v636
        %v1017 = vpop.permute.xlu0 %1016
        %v1019 = vmul.f32 %v470, %v1017
        %v1020 = vmul.f32 %v1019, 1.442695
        %v1021 = vpow.pop %v1020
        %1022 = vset.pattern.permute.xlu0 2
        %1023 = vperm.xlu0 %1022, %v635
        %v1024 = vpop.permute.xlu0 %1023
        %v1026 = vmul.f32 %v1024, %v1021
        %s1027 = scalar_lea.vmem %s410, 16 [#allocation10]
        %1028 = vst.msk [vmem:[%s1027] sm:$0xff] %vm471, %v1026
        %1029 = vrot.lane.b32.xlu0 %v441, 104
        %v1030 = vpop.permute.xlu0 %1029
        %1031 = vrot.lane.b32.xlu0 %v442, 104
        %v1032 = vpop.permute.xlu0 %1031
        %v1033 = vsel %vm471, %v1030, 0
        %v1035 = vsel %vm471, %v1032, 0
        %1037 = vmatprep.subr.mxu0 0.0
        %1038 = vmatpush1.xpose.msra.mxu0 %v1035
        %1039 = vmatprep.subr.mxu0 0.0
        %1040 = vmatpush1.xpose.msra.mxu0 0.0
        %1041 = vmatprep.subr.mxu0 0.0
        %1042 = vmatpush1.xpose.msra.mxu0 0.0
        %1043 = vmatprep.subr.mxu0 0.0
        %1044 = vmatpush1.xpose.msra.mxu0 0.0
        %1045 = vmatprep.subr.mxu0 0.0
        %1046 = vmatpush1.xpose.msra.mxu0 0.0
        %1047 = vmatprep.subr.mxu0 0.0
        %1048 = vmatpush1.xpose.msra.mxu0 0.0
        %1049 = vmatprep.subr.mxu0 0.0
        %1050 = vmatpush1.xpose.msra.mxu0 0.0
        %1051 = vmatprep.subr.mxu0 0.0
        %1052 = vmatpush1.xpose.msra.mxu0 0.0
        %1053 = vmatprep.subr.mxu0 0.0
        %1054 = vmatpush1.xpose.msra.mxu0 0.0
        %1055 = vmatprep.subr.mxu0 0.0
        %1056 = vmatpush1.xpose.msra.mxu0 0.0
        %1057 = vmatprep.subr.mxu0 0.0
        %1058 = vmatpush1.xpose.msra.mxu0 0.0
        %1059 = vmatprep.subr.mxu0 0.0
        %1060 = vmatpush1.xpose.msra.mxu0 0.0
        %1061 = vmatprep.subr.mxu0 0.0
        %1062 = vmatpush1.xpose.msra.mxu0 0.0
        %1063 = vmatprep.subr.mxu0 0.0
        %1064 = vmatpush1.xpose.msra.mxu0 0.0
        %1065 = vmatprep.subr.mxu0 0.0
        %1066 = vmatpush1.xpose.msra.mxu0 0.0
        %1067 = vmatprep.subr.mxu0 0.0
        %1068 = vmatpush1.xpose.msra.mxu0 0.0
        %1069 = vmatprep.subr.mxu0 0.0
        %1070 = vmatpush1.xpose.msra.mxu0 0.0
        %1071 = vmatprep.subr.mxu0 0.0
        %1072 = vmatpush1.xpose.msra.mxu0 0.0
        %1073 = vmatprep.subr.mxu0 0.0
        %1074 = vmatpush1.xpose.msra.mxu0 0.0
        %1075 = vmatprep.subr.mxu0 0.0
        %1076 = vmatpush1.xpose.msra.mxu0 0.0
        %1077 = vmatprep.subr.mxu0 0.0
        %1078 = vmatpush1.xpose.msra.mxu0 0.0
        %1079 = vmatprep.subr.mxu0 0.0
        %1080 = vmatpush1.xpose.msra.mxu0 0.0
        %1081 = vmatprep.subr.mxu0 0.0
        %1082 = vmatpush1.xpose.msra.mxu0 0.0
        %1083 = vmatprep.subr.mxu0 0.0
        %1084 = vmatpush1.xpose.msra.mxu0 0.0
        %1085 = vmatprep.subr.mxu0 0.0
        %1086 = vmatpush1.xpose.msra.mxu0 0.0
        %1087 = vmatprep.subr.mxu0 0.0
        %1088 = vmatpush1.xpose.msra.mxu0 0.0
        %1089 = vmatprep.subr.mxu0 0.0
        %1090 = vmatpush1.xpose.msra.mxu0 0.0
        %1091 = vmatprep.subr.mxu0 0.0
        %1092 = vmatpush1.xpose.msra.mxu0 0.0
        %1093 = vmatprep.subr.mxu0 0.0
        %1094 = vmatpush1.xpose.msra.mxu0 0.0
        %1095 = vmatprep.subr.mxu0 0.0
        %1096 = vmatpush1.xpose.msra.mxu0 0.0
        %1097 = vmatprep.subr.mxu0 0.0
        %1098 = vmatpush1.xpose.msra.mxu0 0.0
        %1099 = vmatprep.subr.mxu0 0.0
        %1100 = vmatpush1.xpose.msra.mxu0 0.0
        %1101 = vmatprep.mubr.f32.mxu0 0.0
        %1102 = vmatmul.mubr.f32.gmra.mrb[0].mxu0 %v1033
        %v1103 = vpop.f32.mrb[0].mxu0
        %v1104 = vadd.f32 0.0, %v1103
        %v1105 = vpop.f32.mrb[0].mxu0
        %1106 = vdwg.mxu0
        %v1107 = vmul.f32 %v1104, 0.35355338
        %v1108 = vsel %vm471, %v1107, -inf
        %1109 = vmax.xlane.f32.xlu0 %v1108
        %v1110 = vpop.xlane.xlu0 %1109
        %v1111 = vsub.f32 %v1107, %v1110
        %v1112 = vmul.f32 %v1111, 1.442695
        %v1113 = vpow.pop %v1112
        %v1114 = vsel %vm471, %v1113, 0.0
        %1115 = vadd.xlane.f32.xlu0 %v1114
        %v1116 = vpop.xlane.xlu0 %1115
        %v1117 = vrcp.pop %v1116
        %v1118 = vmul.f32 %v1113, %v1117
        %s1119 = scalar_lea.vmem %s403, 24 [#allocation8]
        %1120 = vst.msk [vmem:[%s1119] sm:$0xff] %vm471, %v1118
        %1121 = vrot.lane.b32.xlu0 %v443, 104
        %v1122 = vpop.permute.xlu0 %1121
        %v1125 = vsel %vm471, %v1118, 0
        %1127 = vmatprep.subr.mxu0 0.0
        %1128 = vmatpush1.msra.mxu0 %v1122
        %1129 = vmatprep.subr.mxu0 0.0
        %1130 = vmatpush1.msra.mxu0 0.0
        %1131 = vmatprep.subr.mxu0 0.0
        %1132 = vmatpush1.msra.mxu0 0.0
        %1133 = vmatprep.subr.mxu0 0.0
        %1134 = vmatpush1.msra.mxu0 0.0
        %1135 = vmatprep.subr.mxu0 0.0
        %1136 = vmatpush1.msra.mxu0 0.0
        %1137 = vmatprep.subr.mxu0 0.0
        %1138 = vmatpush1.msra.mxu0 0.0
        %1139 = vmatprep.subr.mxu0 0.0
        %1140 = vmatpush1.msra.mxu0 0.0
        %1141 = vmatprep.subr.mxu0 0.0
        %1142 = vmatpush1.msra.mxu0 0.0
        %1143 = vmatprep.subr.mxu0 0.0
        %1144 = vmatpush1.msra.mxu0 0.0
        %1145 = vmatprep.subr.mxu0 0.0
        %1146 = vmatpush1.msra.mxu0 0.0
        %1147 = vmatprep.subr.mxu0 0.0
        %1148 = vmatpush1.msra.mxu0 0.0
        %1149 = vmatprep.subr.mxu0 0.0
        %1150 = vmatpush1.msra.mxu0 0.0
        %1151 = vmatprep.subr.mxu0 0.0
        %1152 = vmatpush1.msra.mxu0 0.0
        %1153 = vmatprep.subr.mxu0 0.0
        %1154 = vmatpush1.msra.mxu0 0.0
        %1155 = vmatprep.subr.mxu0 0.0
        %1156 = vmatpush1.msra.mxu0 0.0
        %1157 = vmatprep.subr.mxu0 0.0
        %1158 = vmatpush1.msra.mxu0 0.0
        %1159 = vmatprep.subr.mxu0 0.0
        %1160 = vmatpush1.msra.mxu0 0.0
        %1161 = vmatprep.subr.mxu0 0.0
        %1162 = vmatpush1.msra.mxu0 0.0
        %1163 = vmatprep.subr.mxu0 0.0
        %1164 = vmatpush1.msra.mxu0 0.0
        %1165 = vmatprep.subr.mxu0 0.0
        %1166 = vmatpush1.msra.mxu0 0.0
        %1167 = vmatprep.subr.mxu0 0.0
        %1168 = vmatpush1.msra.mxu0 0.0
        %1169 = vmatprep.subr.mxu0 0.0
        %1170 = vmatpush1.msra.mxu0 0.0
        %1171 = vmatprep.subr.mxu0 0.0
        %1172 = vmatpush1.msra.mxu0 0.0
        %1173 = vmatprep.subr.mxu0 0.0
        %1174 = vmatpush1.msra.mxu0 0.0
        %1175 = vmatprep.subr.mxu0 0.0
        %1176 = vmatpush1.msra.mxu0 0.0
        %1177 = vmatprep.subr.mxu0 0.0
        %1178 = vmatpush1.msra.mxu0 0.0
        %1179 = vmatprep.subr.mxu0 0.0
        %1180 = vmatpush1.msra.mxu0 0.0
        %1181 = vmatprep.subr.mxu0 0.0
        %1182 = vmatpush1.msra.mxu0 0.0
        %1183 = vmatprep.subr.mxu0 0.0
        %1184 = vmatpush1.msra.mxu0 0.0
        %1185 = vmatprep.subr.mxu0 0.0
        %1186 = vmatpush1.msra.mxu0 0.0
        %1187 = vmatprep.subr.mxu0 0.0
        %1188 = vmatpush1.msra.mxu0 0.0
        %1189 = vmatprep.subr.mxu0 0.0
        %1190 = vmatpush1.msra.mxu0 0.0
        %1191 = vmatprep.mubr.f32.mxu0 0.0
        %1192 = vmatmul.mubr.f32.gmra.mrb[0].mxu0 %v1125
        %v1193 = vpop.f32.mrb[0].mxu0
        %v1194 = vadd.f32 0.0, %v1193
        %v1195 = vpop.f32.mrb[0].mxu0
        %1196 = vdwg.mxu0
        %1198 = vrot.lane.b32.xlu0 %v1194, 24
        %v1199 = vpop.permute.xlu0 %1198
        %vm1201 = vcmask 261312
        %1202 = vst.msk [vmem:[%s396] sm:$0xff] %vm1201, %v1199
        %1203 = vset.pattern.permute.xlu0 3
        %1204 = vperm.xlu0 %1203, %v636
        %v1205 = vpop.permute.xlu0 %1204
        %v1207 = vmul.f32 %v470, %v1205
        %v1208 = vmul.f32 %v1207, 1.442695
        %v1209 = vpow.pop %v1208
        %1210 = vset.pattern.permute.xlu0 3
        %1211 = vperm.xlu0 %1210, %v635
        %v1212 = vpop.permute.xlu0 %1211
        %v1214 = vmul.f32 %v1212, %v1209
        %s1215 = scalar_lea.vmem %s410, 24 [#allocation10]
        %1216 = vst.msk [vmem:[%s1215] sm:$0xff] %vm471, %v1214
        %s1217 = sand.u32 %s161, 1
        %s1218 = scalar_lea.sflag [#allocation4], %s1217
        %s1219 = sand.u32 %s161, 1
        %s1220 = smul.addr %s1219, 8
        %s1221 = scalar_lea.vmem [#allocation7], %s1220
        %s1222 = sand.u32 %s31, 1
        %s1223 = scalar_lea.sflag [#allocation9], %s1222
        %s1224 = sand.u32 %s189, 1
        %s1225 = smul.addr %s1224, 32
        %s1226 = scalar_lea.vmem [#allocation8], %s1225
        %s1227 = sand.u32 %s31, 1
        %s1228 = scalar_lea.sflag [#allocation9], %s1227
        %s1229 = sand.u32 %s217, 1
        %s1230 = smul.addr %s1229, 32
        %s1231 = scalar_lea.vmem [#allocation10], %s1230
        %p1232 = scmp.lt.s32.totalorder %s35, 1
        %s1233 = scalar_select %p1232, %s35, 1
        %p1234 = scmp.lt.s32.totalorder %s36, 0
        %s1235 = scalar_select %p1234, %s36, 0
        %s1236 = sadd.s32 %s1235, %s1233
        %s1237 = smul.addr %s1236, 8
        %s1238 = scalar_lea.vmem %s7, %s1237
        // Predicated region
        $region45: #{tpu_custom_call.1} parent=35 // pred_check
          %p1239 = pneg %p171
        $region46: #{tpu_custom_call.1} parent=35 // pred_check_branch
          %1241 = sbr.rel (%p1239) target = $region48
        $region47: #{tpu_custom_call.1} parent=35 // pred_region
          %s1243 = ssub.s32 128, 128
          %1244 = vsyncadd %s1218, %s1243
          %s1245 = sadd.s32 %s36, %s35
          %s1246 = smul.addr %s1245, 128
          %s1247 = scalar_lea.hbm %s4, %s1246
          %s1249 = sshll.u32 %s1221, 4
          %s1250 = int_to_ptr.vmem [resolvable:$true] %s1249
          %1252 = dma.vmem_to_hbm [thread:$0]  %s1250, 128, %s1247, %s1218
        $region48: #{tpu_custom_call.1} parent=35 // pred_fallthru
          _
        // Predicated region
        $region49: #{tpu_custom_call.1} parent=35 // pred_check
          %p1253 = pneg %p199
        $region50: #{tpu_custom_call.1} parent=35 // pred_check_branch
          %1255 = sbr.rel (%p1253) target = $region52
        $region51: #{tpu_custom_call.1} parent=35 // pred_region
          %s1257 = ssub.s32 512, 512
          %1258 = vsyncadd %s1223, %s1257
          %s1259 = smul.addr %s35, 4
          %s1260 = sadd.s32 %s36, %s1259
          %s1261 = smul.addr %s1260, 128
          %s1262 = scalar_lea.hbm %s5, %s1261
          %s1263 = sshll.u32 %s1226, 4
          %s1264 = int_to_ptr.vmem [resolvable:$true] %s1263
          %1269 = dma.vmem_to_hbm [thread:$0]  %s1264, 512, %s1262, %s1223, 128, 128, 8
        $region52: #{tpu_custom_call.1} parent=35 // pred_fallthru
          _
        // Predicated region
        $region53: #{tpu_custom_call.1} parent=35 // pred_check
          %p1270 = pneg %p227
        $region54: #{tpu_custom_call.1} parent=35 // pred_check_branch
          %1272 = sbr.rel (%p1270) target = $region56
        $region55: #{tpu_custom_call.1} parent=35 // pred_region
          %s1274 = ssub.s32 512, 512
          %1275 = vsyncadd %s1228, %s1274
          %s1276 = smul.addr %s35, 4
          %s1277 = sadd.s32 %s36, %s1276
          %s1278 = smul.addr %s1277, 128
          %s1279 = scalar_lea.hbm %s6, %s1278
          %s1280 = sshll.u32 %s1231, 4
          %s1281 = int_to_ptr.vmem [resolvable:$true] %s1280
          %1286 = dma.vmem_to_hbm [thread:$0]  %s1281, 512, %s1279, %s1228, 128, 128, 8
        $region56: #{tpu_custom_call.1} parent=35 // pred_fallthru
          _
        // Predicated region
        $region57: #{tpu_custom_call.1} parent=35 // pred_check
          %p1287 = pneg %p255
        $region58: #{tpu_custom_call.1} parent=35 // pred_check_branch
          %1289 = sbr.rel (%p1287) target = $region60
        $region59: #{tpu_custom_call.1} parent=35 // pred_region
          _
        $region60: #{tpu_custom_call.1} parent=35 // pred_fallthru
          _
      $region36: #{tpu_custom_call.1} parent=5 // pred_fallthru
        _
      %p1290 = scmp.le.s32.totalorder 2, %s26
      // Predicated region
      $region61: #{tpu_custom_call.1} parent=5 // pred_check
        %p1291 = pneg %p1290
      $region62: #{tpu_custom_call.1} parent=5 // pred_check_branch
        %1293 = sbr.rel (%p1291) target = $region64
      $region63: #{tpu_custom_call.1} parent=5 // pred_region
        %s1294 = ssub.s32 %s26, 2
        // Predicated region
        $region65: #{tpu_custom_call.1} parent=63 // pred_check
          %p1295 = pneg %p177
        $region66: #{tpu_custom_call.1} parent=63 // pred_check_branch
          %1297 = sbr.rel (%p1295) target = $region68
        $region67: #{tpu_custom_call.1} parent=63 // pred_region
          %s1298 = sand.u32 %s162, 1
          %s1299 = scalar_lea.sflag [#allocation4], %s1298
          %s1300 = sand.u32 %s162, 1
          %s1301 = smul.addr %s1300, 8
          %s1302 = scalar_lea.vmem [#allocation7], %s1301
          %1303 = dma.done %s1299, 128
        $region68: #{tpu_custom_call.1} parent=63 // pred_fallthru
          _
        // Predicated region
        $region69: #{tpu_custom_call.1} parent=63 // pred_check
          %p1304 = pneg %p205
        $region70: #{tpu_custom_call.1} parent=63 // pred_check_branch
          %1306 = sbr.rel (%p1304) target = $region72
        $region71: #{tpu_custom_call.1} parent=63 // pred_region
          %s1307 = sand.u32 %s32, 1
          %s1308 = scalar_lea.sflag [#allocation9], %s1307
          %s1309 = sand.u32 %s190, 1
          %s1310 = smul.addr %s1309, 32
          %s1311 = scalar_lea.vmem [#allocation8], %s1310
          %1312 = dma.done %s1308, 512
        $region72: #{tpu_custom_call.1} parent=63 // pred_fallthru
          _
        // Predicated region
        $region73: #{tpu_custom_call.1} parent=63 // pred_check
          %p1313 = pneg %p233
        $region74: #{tpu_custom_call.1} parent=63 // pred_check_branch
          %1315 = sbr.rel (%p1313) target = $region76
        $region75: #{tpu_custom_call.1} parent=63 // pred_region
          %s1316 = sand.u32 %s32, 1
          %s1317 = scalar_lea.sflag [#allocation9], %s1316
          %s1318 = sand.u32 %s218, 1
          %s1319 = smul.addr %s1318, 32
          %s1320 = scalar_lea.vmem [#allocation10], %s1319
          %1321 = dma.done %s1317, 512
        $region76: #{tpu_custom_call.1} parent=63 // pred_fallthru
          _
        // Predicated region
        $region77: #{tpu_custom_call.1} parent=63 // pred_check
          %p1322 = pneg %p261
        $region78: #{tpu_custom_call.1} parent=63 // pred_check_branch
          %1324 = sbr.rel (%p1322) target = $region80
        $region79: #{tpu_custom_call.1} parent=63 // pred_region
          %p1325 = scmp.lt.s32.totalorder %s37, 1
          %s1326 = scalar_select %p1325, %s37, 1
          %p1327 = scmp.lt.s32.totalorder %s38, 0
          %s1328 = scalar_select %p1327, %s38, 0
          %s1329 = sadd.s32 %s1328, %s1326
          %s1330 = smul.addr %s1329, 8
          %s1331 = scalar_lea.vmem %s7, %s1330
        $region80: #{tpu_custom_call.1} parent=63 // pred_fallthru
          _
      $region64: #{tpu_custom_call.1} parent=5 // pred_fallthru
        _
    $region6: #{tpu_custom_call.1} parent=1 // loop_footer
      %s30 = sadd.s32 1, %s26
    $region7: #{tpu_custom_call.1} parent=1 // loop_footer_branch
      %25 = sbr.rel target = $region3
    $region8: #{tpu_custom_call.1} parent=1 // loop_exit
      _
    %1332 = vsyncpa [#allocation3], 1
    %s1333 = scalar_lea.sflag [#allocation3], 1
    %1334 = vsyncpa %s1333, 1
    %1335 = vsyncpa [#allocation6], 1
    %s1336 = scalar_lea.sflag [#allocation6], 1
    %1337 = vsyncpa %s1336, 1
    %1338 = vsyncpa [#allocation4], 1
    %s1339 = scalar_lea.sflag [#allocation4], 1
    %1340 = vsyncpa %s1339, 1
    %1341 = vsyncpa [#allocation9], 1
    %s1342 = scalar_lea.sflag [#allocation9], 1
    %1343 = vsyncpa %s1342, 1

</llo_original>
